<compile_context>
chip_gen: v5e
topology: v5e:2x2
jax: 0.10.0
libtpu: 0.0.40
codegen_flags: <defaults>
</compile_context>

<pallas_src>
import functools
import math

import jax
import jax.numpy as jnp
from jax.experimental import pallas as pl
from jax.experimental.pallas import tpu as pltpu


# ----------------------------------------------------------------------------
# Fused forward kernel (single invocation, no grid, everything in vregs).
# ----------------------------------------------------------------------------
def _liangwei_fused_kernel(
    xpad_ref,            # (B, L+16, C_in)  shared pad-8 input, channels-last
    wc_ref, bc_ref,      # (16*C_in, 3*C_out), (1, 3*C_out)  combined conv
    wih0_ref, whh0_ref, b0_ref,   # (3*C_out, 4H), (H, 4H), (1, 4H)
    w1f_ref, b1_ref,              # (2H, 4H) fused [W_ih_l1; W_hh_l1], (1, 4H)
    fcw_ref, fcb_ref,             # (1, H), (1, 1)
    out_ref,                      # (B, 1)
    *, l_out, mps, hidden, avg_k, k_taps):
    B = xpad_ref.shape[0]
    H = hidden
    t_len = l_out // mps

    # --- conv4/conv8/conv16 + channel concat as ONE matmul ------------------
    # im2col: cols[b, l, k*C_in + c] = xpad[b, l + k, c]   (register value)
    xpad = xpad_ref[...]
    cols = jnp.concatenate(
        [xpad[:, k:k + l_out, :] for k in range(k_taps)], axis=-1)
    yc = jnp.einsum("blk,ko->blo", cols, wc_ref[...],
                    preferred_element_type=jnp.float32) + bc_ref[...]
    # yc: (B, L_out, 3*C_out) == torch.cat((x4, x8, x16), dim=1) channels-last

    # --- MaxPool1d(mps): window max, kept in vregs (no scratch staging) -----
    pooled = []
    for t in range(t_len):                                   # static, tiny
        win = yc[:, t * mps:(t + 1) * mps, :]
        pooled.append(jnp.max(win, axis=1, keepdims=True))
    xp = jnp.concatenate(pooled, axis=1)                     # (B, T, 3*C_out)

    # --- LSTM layer-0 input projection hoisted out of the recurrence --------
    pre0 = jnp.einsum("btc,ch->bth", xp, wih0_ref[...],
                      preferred_element_type=jnp.float32) + b0_ref[...]

    # --- fused-gate LSTM cell (PyTorch gate order i, f, g, o) ---------------
    def gates_to_hc(gates, c_prev):
        i_f = jax.nn.sigmoid(gates[:, :2 * H])               # i and f together
        o_g = jax.nn.sigmoid(gates[:, 3 * H:])
        g_g = jnp.tanh(gates[:, 2 * H:3 * H])                # no wasted sigmoid
        c_new = i_f[:, H:] * c_prev + i_f[:, :H] * g_g
        h_new = o_g * jnp.tanh(c_new)
        return h_new, c_new

    h1 = jnp.zeros((B, H), jnp.float32)
    c1 = jnp.zeros_like(h1)
    h2 = jnp.zeros_like(h1)
    c2 = jnp.zeros_like(h1)
    h2_sum = jnp.zeros_like(h1)

    # TODO(synk): nn.LSTM inter-layer dropout (p=0.5) is training-only; eval semantics here.
    for t in range(t_len):                       # static, fully unrolled (T=4)
        g1 = pre0[:, t, :] + jnp.dot(h1, whh0_ref[...],
                                     preferred_element_type=jnp.float32)
        h1, c1 = gates_to_hc(g1, c1)
        # layer 1: input + recurrent matmul fused into one (B,2H)@(2H,4H) push
        z = jnp.concatenate([h1, h2], axis=-1)
        g2 = jnp.dot(z, w1f_ref[...],
                     preferred_element_type=jnp.float32) + b1_ref[...]
        h2, c2 = gates_to_hc(g2, c2)
        if t < avg_k:                            # avg-pool folded into the loop
            h2_sum = h2_sum + h2

    # --- AvgPool1d head + Linear(H -> 1) as VPU mul + lane reduction --------
    mean = h2_sum * (1.0 / float(avg_k))
    out_ref[...] = (jnp.sum(mean * fcw_ref[...], axis=-1, keepdims=True)
                    + fcb_ref[...])


# ----------------------------------------------------------------------------
# One-time weight preparation (kernel layout).  Run ONCE, outside the per-call
# jitted path, so the forward launches only {pad+transpose fusion, pallas_call}.
# ----------------------------------------------------------------------------
def prepare_params(params):
    c_out, c_in, _ = params["conv4_w"].shape
    H = params["w_hh_l0"].shape[1]
    k_taps = 16          # largest kernel size / shared pad-8 im2col window

    def branch_rows(w):  # (C_out, C_in, K) -> (K*C_in, C_out), row = k*C_in + c
        k = w.shape[2]
        return jnp.transpose(w, (2, 1, 0)).reshape(k * c_in, c_out)

    # Combined conv weight: tap offset inside the pad-8 window is (8 - padding).
    wc = jnp.zeros((k_taps * c_in, 3 * c_out), jnp.float32)
    wc = wc.at[6 * c_in:(6 + 4) * c_in, 0 * c_out:1 * c_out].set(
        branch_rows(params["conv4_w"]))                       # K=4,  pad=2
    wc = wc.at[4 * c_in:(4 + 8) * c_in, 1 * c_out:2 * c_out].set(
        branch_rows(params["conv8_w"]))                       # K=8,  pad=4
    wc = wc.at[0 * c_in:16 * c_in, 2 * c_out:3 * c_out].set(
        branch_rows(params["conv16_w"]))                      # K=16, pad=8
    bc = jnp.concatenate([params["conv4_b"], params["conv8_b"],
                          params["conv16_b"]]).reshape(1, 3 * c_out)

    prep = {
        "wc": wc, "bc": bc,
        # LSTM layer 0 (fused-gate layout, PyTorch gate order preserved)
        "wih0": params["w_ih_l0"].T,                          # (3*C_out, 4H)
        "whh0": params["w_hh_l0"].T,                          # (H, 4H)
        "b0": (params["b_ih_l0"] + params["b_hh_l0"]).reshape(1, 4 * H),
        # LSTM layer 1: input + recurrent weights stacked -> one matmul/step
        "w1f": jnp.concatenate([params["w_ih_l1"].T,
                                params["w_hh_l1"].T], axis=0),  # (2H, 4H)
        "b1": (params["b_ih_l1"] + params["b_hh_l1"]).reshape(1, 4 * H),
        # Linear head as a lane-reduction row
        "fcw": params["fc_w"].reshape(1, H),
        "fcb": params["fc_b"].reshape(1, 1),
    }
    # NOTE: casting wc/wih0/whh0/w1f (and the MXU activations) to bf16 is the
    # cheap 2x once this kernel is batched up; kept f32 here for exactness.
    return jax.tree_util.tree_map(lambda a: a.astype(jnp.float32), prep)


# ----------------------------------------------------------------------------
# Per-call wrapper: one activation layout op + a single pallas_call.
# ----------------------------------------------------------------------------
@functools.partial(jax.jit, static_argnames=("max_pool_size", "window_size"))
def liangwei_forward(prep, x_ncw, *, max_pool_size, window_size):
    B, c_in, L = x_ncw.shape
    max_pad, k_taps = 8, 16
    c_out = prep["bc"].shape[1] // 3
    H = prep["whh0"].shape[0]

    # all three branches produce the same output length; assert instead of
    # hardcoding one branch's formula.
    l4, l8, l16 = L + 4 - 4 + 1, L + 8 - 8 + 1, L + 16 - 16 + 1
    assert l4 == l8 == l16, "conv branch output lengths diverge"
    l_out = l4
    t_len = l_out // max_pool_size
    avg_k = int(window_size // max_pool_size)
    # fused head assumes AvgPool covers the full pooled sequence (true for the
    # module's window/max_pool configs).
    assert avg_k == t_len, "fused head assumes AvgPool covers the full pooled sequence"

    # channels-last + shared zero-pad of 8 (one fused XLA op under jit).
    x_blc = jnp.transpose(x_ncw, (0, 2, 1)).astype(jnp.float32)
    xpad = jnp.pad(x_blc, ((0, 0), (max_pad, max_pad), (0, 0)))

    kern = functools.partial(_liangwei_fused_kernel,
                             l_out=l_out, mps=max_pool_size, hidden=H,
                             avg_k=avg_k, k_taps=k_taps)
    # TODO(synk): for multi-window serving on v7x, add a batch grid axis with
    # dimension_semantics=("parallel",) so both TensorCores are used.
    out = pl.pallas_call(
        kern,
        out_shape=jax.ShapeDtypeStruct((B, 1), jnp.float32),
    )(xpad, prep["wc"], prep["bc"],
      prep["wih0"], prep["whh0"], prep["b0"],
      prep["w1f"], prep["b1"],
      prep["fcw"], prep["fcb"])
    return out.reshape(-1, 1)                                # x.view(-1, 1)


# ----------------------------------------------------------------------------
# Pure-JAX reference (independent path: lax.conv + per-step LSTM) for checking.
# ----------------------------------------------------------------------------
def _reference_forward(params, x_ncw, mps, window):
    hp = jax.lax.Precision.HIGHEST

    def conv(x, w, b, pad):
        out = jax.lax.conv_general_dilated(
            x, w, window_strides=(1,), padding=[(pad, pad)],
            dimension_numbers=("NCH", "OIH", "NCH"), precision=hp)
        return out + b[None, :, None]

    x4 = conv(x_ncw, params["conv4_w"], params["conv4_b"], 2)
    x8 = conv(x_ncw, params["conv8_w"], params["conv8_b"], 4)
    x16 = conv(x_ncw, params["conv16_w"], params["conv16_b"], 8)
    xc = jnp.concatenate([x4, x8, x16], axis=1)             # (B, 3C, L_out)
    B, C, L = xc.shape
    Lp = L // mps
    xp = jnp.max(xc[:, :, :Lp * mps].reshape(B, C, Lp, mps), axis=3)
    xt = jnp.transpose(xp, (0, 2, 1))                       # (B, T, 3C)

    def lstm(x, w_ih, w_hh, b_ih, b_hh):
        Hh = w_hh.shape[1]
        h = jnp.zeros((x.shape[0], Hh), jnp.float32)
        c = jnp.zeros_like(h)
        outs = []
        for t in range(x.shape[1]):
            g = (jnp.dot(x[:, t, :], w_ih.T, precision=hp) + b_ih
                 + jnp.dot(h, w_hh.T, precision=hp) + b_hh)
            i = jax.nn.sigmoid(g[:, 0 * Hh:1 * Hh])
            f = jax.nn.sigmoid(g[:, 1 * Hh:2 * Hh])
            gg = jnp.tanh(g[:, 2 * Hh:3 * Hh])
            o = jax.nn.sigmoid(g[:, 3 * Hh:4 * Hh])
            c = f * c + i * gg
            h = o * jnp.tanh(c)
            outs.append(h)
        return jnp.stack(outs, axis=1)

    h1 = lstm(xt, params["w_ih_l0"], params["w_hh_l0"],
              params["b_ih_l0"], params["b_hh_l0"])
    h2 = lstm(h1, params["w_ih_l1"], params["w_hh_l1"],
              params["b_ih_l1"], params["b_hh_l1"])
    avg_k = int(window // mps)
    mean = jnp.mean(h2[:, :avg_k, :], axis=1)
    out = jnp.dot(mean, params["fc_w"].T, precision=hp) + params["fc_b"]
    return out.reshape(-1, 1)


# ----------------------------------------------------------------------------
# Deterministic parameter init (PyTorch-style uniform bounds, synthetic values).
# ----------------------------------------------------------------------------
def init_params(key, c_in, c_out, hidden):
    keys = jax.random.split(key, 16)
    ki = iter(keys)

    def u(k, shape, scale):
        return jax.random.uniform(k, shape, jnp.float32, -scale, scale)

    params = {}
    for ks, name in [(4, "conv4"), (8, "conv8"), (16, "conv16")]:
        s = 1.0 / math.sqrt(c_in * ks)
        params[f"{name}_w"] = u(next(ki), (c_out, c_in, ks), s)
        params[f"{name}_b"] = u(next(ki), (c_out,), s)

    I = c_out * 3
    H = hidden
    s = 1.0 / math.sqrt(H)
    params["w_ih_l0"] = u(next(ki), (4 * H, I), s)
    params["w_hh_l0"] = u(next(ki), (4 * H, H), s)
    params["b_ih_l0"] = u(next(ki), (4 * H,), s)
    params["b_hh_l0"] = u(next(ki), (4 * H,), s)
    params["w_ih_l1"] = u(next(ki), (4 * H, H), s)
    params["w_hh_l1"] = u(next(ki), (4 * H, H), s)
    params["b_ih_l1"] = u(next(ki), (4 * H,), s)
    params["b_hh_l1"] = u(next(ki), (4 * H,), s)

    params["fc_w"] = u(next(ki), (1, H), s)
    params["fc_b"] = u(next(ki), (1,), s)
    return params


if __name__ == "__main__":
    # config: cnn_in_channels=4, cnn_out_channels=8, window_size=16,
    #         max_pool_size=4, rnn_hidden_size=32
    B, C_IN, C_OUT, WINDOW, MPS, HID = 2, 4, 8, 16, 4, 32

    key = jax.random.PRNGKey(0)
    kx, kp = jax.random.split(key)
    x = jax.random.normal(kx, (B, C_IN, WINDOW), jnp.float32)   # NCW like PyTorch
    params = init_params(kp, C_IN, C_OUT, HID)

    # one-time weight packing into kernel layout (outside the per-call path)
    prep = jax.block_until_ready(prepare_params(params))

    out = liangwei_forward(prep, x, max_pool_size=MPS, window_size=WINDOW)
    out = jax.block_until_ready(out)
    assert out.shape == (B, 1)
    assert bool(jnp.all(jnp.isfinite(out)))

    ref = jax.block_until_ready(_reference_forward(params, x, MPS, WINDOW))
    max_err = float(jnp.max(jnp.abs(out - ref)))
    assert max_err < 5e-3, f"mismatch vs reference: {max_err}"

    print("KERNEL_OK")
</pallas_src>

<mosaic_0001>
module attributes {stable_mosaic.version = 11 : i64} {
  func.func @_liangwei_fused_kernel(%arg0: memref<2x32x4xf32, #tpu.memory_space<vmem>>, %arg1: memref<64x24xf32, #tpu.memory_space<vmem>>, %arg2: memref<1x24xf32, #tpu.memory_space<vmem>>, %arg3: memref<24x128xf32, #tpu.memory_space<vmem>>, %arg4: memref<32x128xf32, #tpu.memory_space<vmem>>, %arg5: memref<1x128xf32, #tpu.memory_space<vmem>>, %arg6: memref<64x128xf32, #tpu.memory_space<vmem>>, %arg7: memref<1x128xf32, #tpu.memory_space<vmem>>, %arg8: memref<1x32xf32, #tpu.memory_space<vmem>>, %arg9: memref<1x1xf32, #tpu.memory_space<vmem>>, %arg10: memref<2x1xf32, #tpu.memory_space<vmem>>) attributes {dimension_semantics = [], scalar_prefetch = 0 : i64, scratch_operands = 0 : i64, tpu.core_type = #tpu.core_type<tc>} {
    %c0 = arith.constant 0 : index
    %c0_0 = arith.constant 0 : index
    %c0_1 = arith.constant 0 : index
    %0 = vector.load %arg0[%c0, %c0_0, %c0_1] : memref<2x32x4xf32, #tpu.memory_space<vmem>>, vector<2x32x4xf32>
    %1 = vector.extract_strided_slice %0 {offsets = [0, 0, 0], sizes = [2, 17, 4], strides = [1, 1, 1]} : vector<2x32x4xf32> to vector<2x17x4xf32>
    %2 = vector.extract_strided_slice %0 {offsets = [0, 1, 0], sizes = [2, 17, 4], strides = [1, 1, 1]} : vector<2x32x4xf32> to vector<2x17x4xf32>
    %3 = vector.extract_strided_slice %0 {offsets = [0, 2, 0], sizes = [2, 17, 4], strides = [1, 1, 1]} : vector<2x32x4xf32> to vector<2x17x4xf32>
    %4 = vector.extract_strided_slice %0 {offsets = [0, 3, 0], sizes = [2, 17, 4], strides = [1, 1, 1]} : vector<2x32x4xf32> to vector<2x17x4xf32>
    %5 = vector.extract_strided_slice %0 {offsets = [0, 4, 0], sizes = [2, 17, 4], strides = [1, 1, 1]} : vector<2x32x4xf32> to vector<2x17x4xf32>
    %6 = vector.extract_strided_slice %0 {offsets = [0, 5, 0], sizes = [2, 17, 4], strides = [1, 1, 1]} : vector<2x32x4xf32> to vector<2x17x4xf32>
    %7 = vector.extract_strided_slice %0 {offsets = [0, 6, 0], sizes = [2, 17, 4], strides = [1, 1, 1]} : vector<2x32x4xf32> to vector<2x17x4xf32>
    %8 = vector.extract_strided_slice %0 {offsets = [0, 7, 0], sizes = [2, 17, 4], strides = [1, 1, 1]} : vector<2x32x4xf32> to vector<2x17x4xf32>
    %9 = vector.extract_strided_slice %0 {offsets = [0, 8, 0], sizes = [2, 17, 4], strides = [1, 1, 1]} : vector<2x32x4xf32> to vector<2x17x4xf32>
    %10 = vector.extract_strided_slice %0 {offsets = [0, 9, 0], sizes = [2, 17, 4], strides = [1, 1, 1]} : vector<2x32x4xf32> to vector<2x17x4xf32>
    %11 = vector.extract_strided_slice %0 {offsets = [0, 10, 0], sizes = [2, 17, 4], strides = [1, 1, 1]} : vector<2x32x4xf32> to vector<2x17x4xf32>
    %12 = vector.extract_strided_slice %0 {offsets = [0, 11, 0], sizes = [2, 17, 4], strides = [1, 1, 1]} : vector<2x32x4xf32> to vector<2x17x4xf32>
    %13 = vector.extract_strided_slice %0 {offsets = [0, 12, 0], sizes = [2, 17, 4], strides = [1, 1, 1]} : vector<2x32x4xf32> to vector<2x17x4xf32>
    %14 = vector.extract_strided_slice %0 {offsets = [0, 13, 0], sizes = [2, 17, 4], strides = [1, 1, 1]} : vector<2x32x4xf32> to vector<2x17x4xf32>
    %15 = vector.extract_strided_slice %0 {offsets = [0, 14, 0], sizes = [2, 17, 4], strides = [1, 1, 1]} : vector<2x32x4xf32> to vector<2x17x4xf32>
    %16 = vector.extract_strided_slice %0 {offsets = [0, 15, 0], sizes = [2, 17, 4], strides = [1, 1, 1]} : vector<2x32x4xf32> to vector<2x17x4xf32>
    %17 = tpu.concatenate %1, %2, %3, %4, %5, %6, %7, %8, %9, %10, %11, %12, %13, %14, %15, %16 in 2 : vector<2x17x4xf32>, vector<2x17x4xf32>, vector<2x17x4xf32>, vector<2x17x4xf32>, vector<2x17x4xf32>, vector<2x17x4xf32>, vector<2x17x4xf32>, vector<2x17x4xf32>, vector<2x17x4xf32>, vector<2x17x4xf32>, vector<2x17x4xf32>, vector<2x17x4xf32>, vector<2x17x4xf32>, vector<2x17x4xf32>, vector<2x17x4xf32>, vector<2x17x4xf32> -> vector<2x17x64xf32>
    %c0_2 = arith.constant 0 : index
    %c0_3 = arith.constant 0 : index
    %18 = vector.load %arg1[%c0_2, %c0_3] : memref<64x24xf32, #tpu.memory_space<vmem>>, vector<64x24xf32>
    "tpu.trace_start"() <{level = 10 : i32, message = "blk,ko->blo"}> : () -> ()
    %cst = arith.constant dense<0.000000e+00> : vector<2x17x24xf32>
    %19 = tpu.matmul %17, %18, %cst {dimension_numbers = #tpu.dot_dimension_numbers<[2], [0], [0, 1], [1], [0, 0, 0, 1, 1, 1], [], []>} : vector<2x17x64xf32>, vector<64x24xf32>, vector<2x17x24xf32> -> vector<2x17x24xf32>
    "tpu.trace_stop"() : () -> ()
    %c0_4 = arith.constant 0 : index
    %c0_5 = arith.constant 0 : index
    %20 = vector.load %arg2[%c0_4, %c0_5] : memref<1x24xf32, #tpu.memory_space<vmem>>, vector<1x24xf32>
    %21 = vector.shape_cast %20 : vector<1x24xf32> to vector<1x1x24xf32>
    %22 = vector.broadcast %21 : vector<1x1x24xf32> to vector<2x17x24xf32>
    %23 = arith.addf %19, %22 : vector<2x17x24xf32>
    %24 = vector.extract_strided_slice %23 {offsets = [0, 0, 0], sizes = [2, 4, 24], strides = [1, 1, 1]} : vector<2x17x24xf32> to vector<2x4x24xf32>
    %cst_6 = arith.constant dense<0xFF800000> : vector<2x24xf32>
    %25 = vector.multi_reduction <maximumf>, %24, %cst_6 [1] : vector<2x4x24xf32> to vector<2x24xf32>
    %26 = vector.shape_cast %25 : vector<2x24xf32> to vector<2x1x24xf32>
    %27 = vector.extract_strided_slice %23 {offsets = [0, 4, 0], sizes = [2, 4, 24], strides = [1, 1, 1]} : vector<2x17x24xf32> to vector<2x4x24xf32>
    %cst_7 = arith.constant dense<0xFF800000> : vector<2x24xf32>
    %28 = vector.multi_reduction <maximumf>, %27, %cst_7 [1] : vector<2x4x24xf32> to vector<2x24xf32>
    %29 = vector.shape_cast %28 : vector<2x24xf32> to vector<2x1x24xf32>
    %30 = vector.extract_strided_slice %23 {offsets = [0, 8, 0], sizes = [2, 4, 24], strides = [1, 1, 1]} : vector<2x17x24xf32> to vector<2x4x24xf32>
    %cst_8 = arith.constant dense<0xFF800000> : vector<2x24xf32>
    %31 = vector.multi_reduction <maximumf>, %30, %cst_8 [1] : vector<2x4x24xf32> to vector<2x24xf32>
    %32 = vector.shape_cast %31 : vector<2x24xf32> to vector<2x1x24xf32>
    %33 = vector.extract_strided_slice %23 {offsets = [0, 12, 0], sizes = [2, 4, 24], strides = [1, 1, 1]} : vector<2x17x24xf32> to vector<2x4x24xf32>
    %cst_9 = arith.constant dense<0xFF800000> : vector<2x24xf32>
    %34 = vector.multi_reduction <maximumf>, %33, %cst_9 [1] : vector<2x4x24xf32> to vector<2x24xf32>
    %35 = vector.shape_cast %34 : vector<2x24xf32> to vector<2x1x24xf32>
    %36 = tpu.concatenate %26, %29, %32, %35 in 1 : vector<2x1x24xf32>, vector<2x1x24xf32>, vector<2x1x24xf32>, vector<2x1x24xf32> -> vector<2x4x24xf32>
    %c0_10 = arith.constant 0 : index
    %c0_11 = arith.constant 0 : index
    %37 = vector.load %arg3[%c0_10, %c0_11] : memref<24x128xf32, #tpu.memory_space<vmem>>, vector<24x128xf32>
    "tpu.trace_start"() <{level = 10 : i32, message = "btc,ch->bth"}> : () -> ()
    %cst_12 = arith.constant dense<0.000000e+00> : vector<2x4x128xf32>
    %38 = tpu.matmul %36, %37, %cst_12 {dimension_numbers = #tpu.dot_dimension_numbers<[2], [0], [0, 1], [1], [0, 0, 0, 1, 1, 1], [], []>} : vector<2x4x24xf32>, vector<24x128xf32>, vector<2x4x128xf32> -> vector<2x4x128xf32>
    "tpu.trace_stop"() : () -> ()
    %c0_13 = arith.constant 0 : index
    %c0_14 = arith.constant 0 : index
    %39 = vector.load %arg5[%c0_13, %c0_14] : memref<1x128xf32, #tpu.memory_space<vmem>>, vector<1x128xf32>
    %40 = vector.shape_cast %39 : vector<1x128xf32> to vector<1x1x128xf32>
    %41 = vector.broadcast %40 : vector<1x1x128xf32> to vector<2x4x128xf32>
    %42 = arith.addf %38, %41 : vector<2x4x128xf32>
    %cst_15 = arith.constant 0.000000e+00 : f32
    %43 = vector.broadcast %cst_15 : f32 to vector<2x32xf32>
    %cst_16 = arith.constant 0.000000e+00 : f32
    %44 = vector.broadcast %cst_16 : f32 to vector<2x32xf32>
    %cst_17 = arith.constant 0.000000e+00 : f32
    %45 = vector.broadcast %cst_17 : f32 to vector<2x32xf32>
    %cst_18 = arith.constant 0.000000e+00 : f32
    %46 = vector.broadcast %cst_18 : f32 to vector<2x32xf32>
    %cst_19 = arith.constant 0.000000e+00 : f32
    %47 = vector.broadcast %cst_19 : f32 to vector<2x32xf32>
    %48 = vector.extract_strided_slice %42 {offsets = [0, 0, 0], sizes = [2, 1, 128], strides = [1, 1, 1]} : vector<2x4x128xf32> to vector<2x1x128xf32>
    %49 = vector.shape_cast %48 : vector<2x1x128xf32> to vector<2x128xf32>
    %c0_20 = arith.constant 0 : index
    %c0_21 = arith.constant 0 : index
    %50 = vector.load %arg4[%c0_20, %c0_21] : memref<32x128xf32, #tpu.memory_space<vmem>>, vector<32x128xf32>
    %cst_22 = arith.constant dense<0.000000e+00> : vector<2x128xf32>
    %51 = tpu.matmul %43, %50, %cst_22 {dimension_numbers = #tpu.dot_dimension_numbers<[1], [0], [0], [1], [0, 0, 1, 1], [], []>} : vector<2x32xf32>, vector<32x128xf32>, vector<2x128xf32> -> vector<2x128xf32>
    %52 = arith.addf %49, %51 : vector<2x128xf32>
    %53 = vector.extract_strided_slice %52 {offsets = [0, 0], sizes = [2, 64], strides = [1, 1]} : vector<2x128xf32> to vector<2x64xf32>
    %54 = arith.negf %53 : vector<2x64xf32>
    %55 = math.exp %54 : vector<2x64xf32>
    %cst_23 = arith.constant 1.000000e+00 : f32
    %56 = vector.broadcast %cst_23 : f32 to vector<2x64xf32>
    %57 = arith.addf %56, %55 : vector<2x64xf32>
    %58 = arith.divf %56, %57 : vector<2x64xf32>
    %59 = vector.extract_strided_slice %52 {offsets = [0, 96], sizes = [2, 32], strides = [1, 1]} : vector<2x128xf32> to vector<2x32xf32>
    %60 = arith.negf %59 : vector<2x32xf32>
    %61 = math.exp %60 : vector<2x32xf32>
    %cst_24 = arith.constant 1.000000e+00 : f32
    %62 = vector.broadcast %cst_24 : f32 to vector<2x32xf32>
    %63 = arith.addf %62, %61 : vector<2x32xf32>
    %64 = arith.divf %62, %63 : vector<2x32xf32>
    %65 = vector.extract_strided_slice %52 {offsets = [0, 64], sizes = [2, 32], strides = [1, 1]} : vector<2x128xf32> to vector<2x32xf32>
    %66 = math.tanh %65 : vector<2x32xf32>
    %67 = vector.extract_strided_slice %58 {offsets = [0, 32], sizes = [2, 32], strides = [1, 1]} : vector<2x64xf32> to vector<2x32xf32>
    %68 = arith.mulf %67, %44 : vector<2x32xf32>
    %69 = vector.extract_strided_slice %58 {offsets = [0, 0], sizes = [2, 32], strides = [1, 1]} : vector<2x64xf32> to vector<2x32xf32>
    %70 = arith.mulf %69, %66 : vector<2x32xf32>
    %71 = arith.addf %68, %70 : vector<2x32xf32>
    %72 = math.tanh %71 : vector<2x32xf32>
    %73 = arith.mulf %64, %72 : vector<2x32xf32>
    %74 = tpu.concatenate %73, %45 in 1 : vector<2x32xf32>, vector<2x32xf32> -> vector<2x64xf32>
    %c0_25 = arith.constant 0 : index
    %c0_26 = arith.constant 0 : index
    %75 = vector.load %arg6[%c0_25, %c0_26] : memref<64x128xf32, #tpu.memory_space<vmem>>, vector<64x128xf32>
    %cst_27 = arith.constant dense<0.000000e+00> : vector<2x128xf32>
    %76 = tpu.matmul %74, %75, %cst_27 {dimension_numbers = #tpu.dot_dimension_numbers<[1], [0], [0], [1], [0, 0, 1, 1], [], []>} : vector<2x64xf32>, vector<64x128xf32>, vector<2x128xf32> -> vector<2x128xf32>
    %c0_28 = arith.constant 0 : index
    %c0_29 = arith.constant 0 : index
    %77 = vector.load %arg7[%c0_28, %c0_29] : memref<1x128xf32, #tpu.memory_space<vmem>>, vector<1x128xf32>
    %78 = vector.broadcast %77 : vector<1x128xf32> to vector<2x128xf32>
    %79 = arith.addf %76, %78 : vector<2x128xf32>
    %80 = vector.extract_strided_slice %79 {offsets = [0, 0], sizes = [2, 64], strides = [1, 1]} : vector<2x128xf32> to vector<2x64xf32>
    %81 = arith.negf %80 : vector<2x64xf32>
    %82 = math.exp %81 : vector<2x64xf32>
    %cst_30 = arith.constant 1.000000e+00 : f32
    %83 = vector.broadcast %cst_30 : f32 to vector<2x64xf32>
    %84 = arith.addf %83, %82 : vector<2x64xf32>
    %85 = arith.divf %83, %84 : vector<2x64xf32>
    %86 = vector.extract_strided_slice %79 {offsets = [0, 96], sizes = [2, 32], strides = [1, 1]} : vector<2x128xf32> to vector<2x32xf32>
    %87 = arith.negf %86 : vector<2x32xf32>
    %88 = math.exp %87 : vector<2x32xf32>
    %cst_31 = arith.constant 1.000000e+00 : f32
    %89 = vector.broadcast %cst_31 : f32 to vector<2x32xf32>
    %90 = arith.addf %89, %88 : vector<2x32xf32>
    %91 = arith.divf %89, %90 : vector<2x32xf32>
    %92 = vector.extract_strided_slice %79 {offsets = [0, 64], sizes = [2, 32], strides = [1, 1]} : vector<2x128xf32> to vector<2x32xf32>
    %93 = math.tanh %92 : vector<2x32xf32>
    %94 = vector.extract_strided_slice %85 {offsets = [0, 32], sizes = [2, 32], strides = [1, 1]} : vector<2x64xf32> to vector<2x32xf32>
    %95 = arith.mulf %94, %46 : vector<2x32xf32>
    %96 = vector.extract_strided_slice %85 {offsets = [0, 0], sizes = [2, 32], strides = [1, 1]} : vector<2x64xf32> to vector<2x32xf32>
    %97 = arith.mulf %96, %93 : vector<2x32xf32>
    %98 = arith.addf %95, %97 : vector<2x32xf32>
    %99 = math.tanh %98 : vector<2x32xf32>
    %100 = arith.mulf %91, %99 : vector<2x32xf32>
    %101 = arith.addf %47, %100 : vector<2x32xf32>
    %102 = vector.extract_strided_slice %42 {offsets = [0, 1, 0], sizes = [2, 1, 128], strides = [1, 1, 1]} : vector<2x4x128xf32> to vector<2x1x128xf32>
    %103 = vector.shape_cast %102 : vector<2x1x128xf32> to vector<2x128xf32>
    %c0_32 = arith.constant 0 : index
    %c0_33 = arith.constant 0 : index
    %104 = vector.load %arg4[%c0_32, %c0_33] : memref<32x128xf32, #tpu.memory_space<vmem>>, vector<32x128xf32>
    %cst_34 = arith.constant dense<0.000000e+00> : vector<2x128xf32>
    %105 = tpu.matmul %73, %104, %cst_34 {dimension_numbers = #tpu.dot_dimension_numbers<[1], [0], [0], [1], [0, 0, 1, 1], [], []>} : vector<2x32xf32>, vector<32x128xf32>, vector<2x128xf32> -> vector<2x128xf32>
    %106 = arith.addf %103, %105 : vector<2x128xf32>
    %107 = vector.extract_strided_slice %106 {offsets = [0, 0], sizes = [2, 64], strides = [1, 1]} : vector<2x128xf32> to vector<2x64xf32>
    %108 = arith.negf %107 : vector<2x64xf32>
    %109 = math.exp %108 : vector<2x64xf32>
    %cst_35 = arith.constant 1.000000e+00 : f32
    %110 = vector.broadcast %cst_35 : f32 to vector<2x64xf32>
    %111 = arith.addf %110, %109 : vector<2x64xf32>
    %112 = arith.divf %110, %111 : vector<2x64xf32>
    %113 = vector.extract_strided_slice %106 {offsets = [0, 96], sizes = [2, 32], strides = [1, 1]} : vector<2x128xf32> to vector<2x32xf32>
    %114 = arith.negf %113 : vector<2x32xf32>
    %115 = math.exp %114 : vector<2x32xf32>
    %cst_36 = arith.constant 1.000000e+00 : f32
    %116 = vector.broadcast %cst_36 : f32 to vector<2x32xf32>
    %117 = arith.addf %116, %115 : vector<2x32xf32>
    %118 = arith.divf %116, %117 : vector<2x32xf32>
    %119 = vector.extract_strided_slice %106 {offsets = [0, 64], sizes = [2, 32], strides = [1, 1]} : vector<2x128xf32> to vector<2x32xf32>
    %120 = math.tanh %119 : vector<2x32xf32>
    %121 = vector.extract_strided_slice %112 {offsets = [0, 32], sizes = [2, 32], strides = [1, 1]} : vector<2x64xf32> to vector<2x32xf32>
    %122 = arith.mulf %121, %71 : vector<2x32xf32>
    %123 = vector.extract_strided_slice %112 {offsets = [0, 0], sizes = [2, 32], strides = [1, 1]} : vector<2x64xf32> to vector<2x32xf32>
    %124 = arith.mulf %123, %120 : vector<2x32xf32>
    %125 = arith.addf %122, %124 : vector<2x32xf32>
    %126 = math.tanh %125 : vector<2x32xf32>
    %127 = arith.mulf %118, %126 : vector<2x32xf32>
    %128 = tpu.concatenate %127, %100 in 1 : vector<2x32xf32>, vector<2x32xf32> -> vector<2x64xf32>
    %c0_37 = arith.constant 0 : index
    %c0_38 = arith.constant 0 : index
    %129 = vector.load %arg6[%c0_37, %c0_38] : memref<64x128xf32, #tpu.memory_space<vmem>>, vector<64x128xf32>
    %cst_39 = arith.constant dense<0.000000e+00> : vector<2x128xf32>
    %130 = tpu.matmul %128, %129, %cst_39 {dimension_numbers = #tpu.dot_dimension_numbers<[1], [0], [0], [1], [0, 0, 1, 1], [], []>} : vector<2x64xf32>, vector<64x128xf32>, vector<2x128xf32> -> vector<2x128xf32>
    %c0_40 = arith.constant 0 : index
    %c0_41 = arith.constant 0 : index
    %131 = vector.load %arg7[%c0_40, %c0_41] : memref<1x128xf32, #tpu.memory_space<vmem>>, vector<1x128xf32>
    %132 = vector.broadcast %131 : vector<1x128xf32> to vector<2x128xf32>
    %133 = arith.addf %130, %132 : vector<2x128xf32>
    %134 = vector.extract_strided_slice %133 {offsets = [0, 0], sizes = [2, 64], strides = [1, 1]} : vector<2x128xf32> to vector<2x64xf32>
    %135 = arith.negf %134 : vector<2x64xf32>
    %136 = math.exp %135 : vector<2x64xf32>
    %cst_42 = arith.constant 1.000000e+00 : f32
    %137 = vector.broadcast %cst_42 : f32 to vector<2x64xf32>
    %138 = arith.addf %137, %136 : vector<2x64xf32>
    %139 = arith.divf %137, %138 : vector<2x64xf32>
    %140 = vector.extract_strided_slice %133 {offsets = [0, 96], sizes = [2, 32], strides = [1, 1]} : vector<2x128xf32> to vector<2x32xf32>
    %141 = arith.negf %140 : vector<2x32xf32>
    %142 = math.exp %141 : vector<2x32xf32>
    %cst_43 = arith.constant 1.000000e+00 : f32
    %143 = vector.broadcast %cst_43 : f32 to vector<2x32xf32>
    %144 = arith.addf %143, %142 : vector<2x32xf32>
    %145 = arith.divf %143, %144 : vector<2x32xf32>
    %146 = vector.extract_strided_slice %133 {offsets = [0, 64], sizes = [2, 32], strides = [1, 1]} : vector<2x128xf32> to vector<2x32xf32>
    %147 = math.tanh %146 : vector<2x32xf32>
    %148 = vector.extract_strided_slice %139 {offsets = [0, 32], sizes = [2, 32], strides = [1, 1]} : vector<2x64xf32> to vector<2x32xf32>
    %149 = arith.mulf %148, %98 : vector<2x32xf32>
    %150 = vector.extract_strided_slice %139 {offsets = [0, 0], sizes = [2, 32], strides = [1, 1]} : vector<2x64xf32> to vector<2x32xf32>
    %151 = arith.mulf %150, %147 : vector<2x32xf32>
    %152 = arith.addf %149, %151 : vector<2x32xf32>
    %153 = math.tanh %152 : vector<2x32xf32>
    %154 = arith.mulf %145, %153 : vector<2x32xf32>
    %155 = arith.addf %101, %154 : vector<2x32xf32>
    %156 = vector.extract_strided_slice %42 {offsets = [0, 2, 0], sizes = [2, 1, 128], strides = [1, 1, 1]} : vector<2x4x128xf32> to vector<2x1x128xf32>
    %157 = vector.shape_cast %156 : vector<2x1x128xf32> to vector<2x128xf32>
    %c0_44 = arith.constant 0 : index
    %c0_45 = arith.constant 0 : index
    %158 = vector.load %arg4[%c0_44, %c0_45] : memref<32x128xf32, #tpu.memory_space<vmem>>, vector<32x128xf32>
    %cst_46 = arith.constant dense<0.000000e+00> : vector<2x128xf32>
    %159 = tpu.matmul %127, %158, %cst_46 {dimension_numbers = #tpu.dot_dimension_numbers<[1], [0], [0], [1], [0, 0, 1, 1], [], []>} : vector<2x32xf32>, vector<32x128xf32>, vector<2x128xf32> -> vector<2x128xf32>
    %160 = arith.addf %157, %159 : vector<2x128xf32>
    %161 = vector.extract_strided_slice %160 {offsets = [0, 0], sizes = [2, 64], strides = [1, 1]} : vector<2x128xf32> to vector<2x64xf32>
    %162 = arith.negf %161 : vector<2x64xf32>
    %163 = math.exp %162 : vector<2x64xf32>
    %cst_47 = arith.constant 1.000000e+00 : f32
    %164 = vector.broadcast %cst_47 : f32 to vector<2x64xf32>
    %165 = arith.addf %164, %163 : vector<2x64xf32>
    %166 = arith.divf %164, %165 : vector<2x64xf32>
    %167 = vector.extract_strided_slice %160 {offsets = [0, 96], sizes = [2, 32], strides = [1, 1]} : vector<2x128xf32> to vector<2x32xf32>
    %168 = arith.negf %167 : vector<2x32xf32>
    %169 = math.exp %168 : vector<2x32xf32>
    %cst_48 = arith.constant 1.000000e+00 : f32
    %170 = vector.broadcast %cst_48 : f32 to vector<2x32xf32>
    %171 = arith.addf %170, %169 : vector<2x32xf32>
    %172 = arith.divf %170, %171 : vector<2x32xf32>
    %173 = vector.extract_strided_slice %160 {offsets = [0, 64], sizes = [2, 32], strides = [1, 1]} : vector<2x128xf32> to vector<2x32xf32>
    %174 = math.tanh %173 : vector<2x32xf32>
    %175 = vector.extract_strided_slice %166 {offsets = [0, 32], sizes = [2, 32], strides = [1, 1]} : vector<2x64xf32> to vector<2x32xf32>
    %176 = arith.mulf %175, %125 : vector<2x32xf32>
    %177 = vector.extract_strided_slice %166 {offsets = [0, 0], sizes = [2, 32], strides = [1, 1]} : vector<2x64xf32> to vector<2x32xf32>
    %178 = arith.mulf %177, %174 : vector<2x32xf32>
    %179 = arith.addf %176, %178 : vector<2x32xf32>
    %180 = math.tanh %179 : vector<2x32xf32>
    %181 = arith.mulf %172, %180 : vector<2x32xf32>
    %182 = tpu.concatenate %181, %154 in 1 : vector<2x32xf32>, vector<2x32xf32> -> vector<2x64xf32>
    %c0_49 = arith.constant 0 : index
    %c0_50 = arith.constant 0 : index
    %183 = vector.load %arg6[%c0_49, %c0_50] : memref<64x128xf32, #tpu.memory_space<vmem>>, vector<64x128xf32>
    %cst_51 = arith.constant dense<0.000000e+00> : vector<2x128xf32>
    %184 = tpu.matmul %182, %183, %cst_51 {dimension_numbers = #tpu.dot_dimension_numbers<[1], [0], [0], [1], [0, 0, 1, 1], [], []>} : vector<2x64xf32>, vector<64x128xf32>, vector<2x128xf32> -> vector<2x128xf32>
    %c0_52 = arith.constant 0 : index
    %c0_53 = arith.constant 0 : index
    %185 = vector.load %arg7[%c0_52, %c0_53] : memref<1x128xf32, #tpu.memory_space<vmem>>, vector<1x128xf32>
    %186 = vector.broadcast %185 : vector<1x128xf32> to vector<2x128xf32>
    %187 = arith.addf %184, %186 : vector<2x128xf32>
    %188 = vector.extract_strided_slice %187 {offsets = [0, 0], sizes = [2, 64], strides = [1, 1]} : vector<2x128xf32> to vector<2x64xf32>
    %189 = arith.negf %188 : vector<2x64xf32>
    %190 = math.exp %189 : vector<2x64xf32>
    %cst_54 = arith.constant 1.000000e+00 : f32
    %191 = vector.broadcast %cst_54 : f32 to vector<2x64xf32>
    %192 = arith.addf %191, %190 : vector<2x64xf32>
    %193 = arith.divf %191, %192 : vector<2x64xf32>
    %194 = vector.extract_strided_slice %187 {offsets = [0, 96], sizes = [2, 32], strides = [1, 1]} : vector<2x128xf32> to vector<2x32xf32>
    %195 = arith.negf %194 : vector<2x32xf32>
    %196 = math.exp %195 : vector<2x32xf32>
    %cst_55 = arith.constant 1.000000e+00 : f32
    %197 = vector.broadcast %cst_55 : f32 to vector<2x32xf32>
    %198 = arith.addf %197, %196 : vector<2x32xf32>
    %199 = arith.divf %197, %198 : vector<2x32xf32>
    %200 = vector.extract_strided_slice %187 {offsets = [0, 64], sizes = [2, 32], strides = [1, 1]} : vector<2x128xf32> to vector<2x32xf32>
    %201 = math.tanh %200 : vector<2x32xf32>
    %202 = vector.extract_strided_slice %193 {offsets = [0, 32], sizes = [2, 32], strides = [1, 1]} : vector<2x64xf32> to vector<2x32xf32>
    %203 = arith.mulf %202, %152 : vector<2x32xf32>
    %204 = vector.extract_strided_slice %193 {offsets = [0, 0], sizes = [2, 32], strides = [1, 1]} : vector<2x64xf32> to vector<2x32xf32>
    %205 = arith.mulf %204, %201 : vector<2x32xf32>
    %206 = arith.addf %203, %205 : vector<2x32xf32>
    %207 = math.tanh %206 : vector<2x32xf32>
    %208 = arith.mulf %199, %207 : vector<2x32xf32>
    %209 = arith.addf %155, %208 : vector<2x32xf32>
    %210 = vector.extract_strided_slice %42 {offsets = [0, 3, 0], sizes = [2, 1, 128], strides = [1, 1, 1]} : vector<2x4x128xf32> to vector<2x1x128xf32>
    %211 = vector.shape_cast %210 : vector<2x1x128xf32> to vector<2x128xf32>
    %c0_56 = arith.constant 0 : index
    %c0_57 = arith.constant 0 : index
    %212 = vector.load %arg4[%c0_56, %c0_57] : memref<32x128xf32, #tpu.memory_space<vmem>>, vector<32x128xf32>
    %cst_58 = arith.constant dense<0.000000e+00> : vector<2x128xf32>
    %213 = tpu.matmul %181, %212, %cst_58 {dimension_numbers = #tpu.dot_dimension_numbers<[1], [0], [0], [1], [0, 0, 1, 1], [], []>} : vector<2x32xf32>, vector<32x128xf32>, vector<2x128xf32> -> vector<2x128xf32>
    %214 = arith.addf %211, %213 : vector<2x128xf32>
    %215 = vector.extract_strided_slice %214 {offsets = [0, 0], sizes = [2, 64], strides = [1, 1]} : vector<2x128xf32> to vector<2x64xf32>
    %216 = arith.negf %215 : vector<2x64xf32>
    %217 = math.exp %216 : vector<2x64xf32>
    %cst_59 = arith.constant 1.000000e+00 : f32
    %218 = vector.broadcast %cst_59 : f32 to vector<2x64xf32>
    %219 = arith.addf %218, %217 : vector<2x64xf32>
    %220 = arith.divf %218, %219 : vector<2x64xf32>
    %221 = vector.extract_strided_slice %214 {offsets = [0, 96], sizes = [2, 32], strides = [1, 1]} : vector<2x128xf32> to vector<2x32xf32>
    %222 = arith.negf %221 : vector<2x32xf32>
    %223 = math.exp %222 : vector<2x32xf32>
    %cst_60 = arith.constant 1.000000e+00 : f32
    %224 = vector.broadcast %cst_60 : f32 to vector<2x32xf32>
    %225 = arith.addf %224, %223 : vector<2x32xf32>
    %226 = arith.divf %224, %225 : vector<2x32xf32>
    %227 = vector.extract_strided_slice %214 {offsets = [0, 64], sizes = [2, 32], strides = [1, 1]} : vector<2x128xf32> to vector<2x32xf32>
    %228 = math.tanh %227 : vector<2x32xf32>
    %229 = vector.extract_strided_slice %220 {offsets = [0, 32], sizes = [2, 32], strides = [1, 1]} : vector<2x64xf32> to vector<2x32xf32>
    %230 = arith.mulf %229, %179 : vector<2x32xf32>
    %231 = vector.extract_strided_slice %220 {offsets = [0, 0], sizes = [2, 32], strides = [1, 1]} : vector<2x64xf32> to vector<2x32xf32>
    %232 = arith.mulf %231, %228 : vector<2x32xf32>
    %233 = arith.addf %230, %232 : vector<2x32xf32>
    %234 = math.tanh %233 : vector<2x32xf32>
    %235 = arith.mulf %226, %234 : vector<2x32xf32>
    %236 = tpu.concatenate %235, %208 in 1 : vector<2x32xf32>, vector<2x32xf32> -> vector<2x64xf32>
    %c0_61 = arith.constant 0 : index
    %c0_62 = arith.constant 0 : index
    %237 = vector.load %arg6[%c0_61, %c0_62] : memref<64x128xf32, #tpu.memory_space<vmem>>, vector<64x128xf32>
    %cst_63 = arith.constant dense<0.000000e+00> : vector<2x128xf32>
    %238 = tpu.matmul %236, %237, %cst_63 {dimension_numbers = #tpu.dot_dimension_numbers<[1], [0], [0], [1], [0, 0, 1, 1], [], []>} : vector<2x64xf32>, vector<64x128xf32>, vector<2x128xf32> -> vector<2x128xf32>
    %c0_64 = arith.constant 0 : index
    %c0_65 = arith.constant 0 : index
    %239 = vector.load %arg7[%c0_64, %c0_65] : memref<1x128xf32, #tpu.memory_space<vmem>>, vector<1x128xf32>
    %240 = vector.broadcast %239 : vector<1x128xf32> to vector<2x128xf32>
    %241 = arith.addf %238, %240 : vector<2x128xf32>
    %242 = vector.extract_strided_slice %241 {offsets = [0, 0], sizes = [2, 64], strides = [1, 1]} : vector<2x128xf32> to vector<2x64xf32>
    %243 = arith.negf %242 : vector<2x64xf32>
    %244 = math.exp %243 : vector<2x64xf32>
    %cst_66 = arith.constant 1.000000e+00 : f32
    %245 = vector.broadcast %cst_66 : f32 to vector<2x64xf32>
    %246 = arith.addf %245, %244 : vector<2x64xf32>
    %247 = arith.divf %245, %246 : vector<2x64xf32>
    %248 = vector.extract_strided_slice %241 {offsets = [0, 96], sizes = [2, 32], strides = [1, 1]} : vector<2x128xf32> to vector<2x32xf32>
    %249 = arith.negf %248 : vector<2x32xf32>
    %250 = math.exp %249 : vector<2x32xf32>
    %cst_67 = arith.constant 1.000000e+00 : f32
    %251 = vector.broadcast %cst_67 : f32 to vector<2x32xf32>
    %252 = arith.addf %251, %250 : vector<2x32xf32>
    %253 = arith.divf %251, %252 : vector<2x32xf32>
    %254 = vector.extract_strided_slice %241 {offsets = [0, 64], sizes = [2, 32], strides = [1, 1]} : vector<2x128xf32> to vector<2x32xf32>
    %255 = math.tanh %254 : vector<2x32xf32>
    %256 = vector.extract_strided_slice %247 {offsets = [0, 32], sizes = [2, 32], strides = [1, 1]} : vector<2x64xf32> to vector<2x32xf32>
    %257 = arith.mulf %256, %206 : vector<2x32xf32>
    %258 = vector.extract_strided_slice %247 {offsets = [0, 0], sizes = [2, 32], strides = [1, 1]} : vector<2x64xf32> to vector<2x32xf32>
    %259 = arith.mulf %258, %255 : vector<2x32xf32>
    %260 = arith.addf %257, %259 : vector<2x32xf32>
    %261 = math.tanh %260 : vector<2x32xf32>
    %262 = arith.mulf %253, %261 : vector<2x32xf32>
    %263 = arith.addf %209, %262 : vector<2x32xf32>
    %cst_68 = arith.constant 2.500000e-01 : f32
    %264 = vector.broadcast %cst_68 : f32 to vector<2x32xf32>
    %265 = arith.mulf %263, %264 : vector<2x32xf32>
    %c0_69 = arith.constant 0 : index
    %c0_70 = arith.constant 0 : index
    %266 = vector.load %arg8[%c0_69, %c0_70] : memref<1x32xf32, #tpu.memory_space<vmem>>, vector<1x32xf32>
    %267 = vector.broadcast %266 : vector<1x32xf32> to vector<2x32xf32>
    %268 = arith.mulf %265, %267 : vector<2x32xf32>
    %cst_71 = arith.constant dense<0.000000e+00> : vector<2xf32>
    %269 = vector.multi_reduction <add>, %268, %cst_71 [1] : vector<2x32xf32> to vector<2xf32>
    %270 = vector.shape_cast %269 : vector<2xf32> to vector<2x1xf32>
    %c0_72 = arith.constant 0 : index
    %c0_73 = arith.constant 0 : index
    %271 = vector.load %arg9[%c0_72, %c0_73] : memref<1x1xf32, #tpu.memory_space<vmem>>, vector<1x1xf32>
    %272 = vector.broadcast %271 : vector<1x1xf32> to vector<2x1xf32>
    %273 = arith.addf %270, %272 : vector<2x1xf32>
    %c0_74 = arith.constant 0 : index
    %c0_75 = arith.constant 0 : index
    %274 = vector.load %arg10[%c0_74, %c0_75] : memref<2x1xf32, #tpu.memory_space<vmem>>, vector<2x1xf32>
    tpu.vector_store %arg10[%c0_74, %c0_75], %273 {strides = array<i32>} : memref<2x1xf32, #tpu.memory_space<vmem>>, vector<2x1xf32>,
    return
  }
}

</mosaic_0001>

<llo_original>
// kernel: liangwei_forward.1
$region0: #{liangwei_forward.1}
  #allocation0 [shape = 'u32[]', space=smem, size = 0x4, offset = 0x4, fixed_abs, tag = 'smem constant byte address 0x4 - core index']
  #allocation1 [shape = 'u32[72,128]{1,0:T(1,128)}', space=vmem, size = 0x9000, scoped, tag = 'internal scratch']
  #allocation2 [shape = 'f32[1,1]{1,0:T(1,128)S(1)}', space=vmem, size = 0x200, scoped, tag = 'scoped memory for liangwei_forward.1']
  %s0 = inlined_call_operand.vmem [shape: f32[2,32,4], index: 0, kind: input, shape index: {}]
  %s1 = inlined_call_operand.vmem [shape: f32[64,24], index: 1, kind: input, shape index: {}]
  %s2 = inlined_call_operand.vmem [shape: f32[1,24], index: 2, kind: input, shape index: {}]
  %s3 = inlined_call_operand.vmem [shape: f32[24,128], index: 3, kind: input, shape index: {}]
  %s4 = inlined_call_operand.vmem [shape: f32[32,128], index: 4, kind: input, shape index: {}]
  %s5 = inlined_call_operand.vmem [shape: f32[1,128], index: 5, kind: input, shape index: {}]
  %s6 = inlined_call_operand.vmem [shape: f32[64,128], index: 6, kind: input, shape index: {}]
  %s7 = inlined_call_operand.vmem [shape: f32[1,128], index: 7, kind: input, shape index: {}]
  %s8 = inlined_call_operand.vmem [shape: f32[1,32], index: 8, kind: input, shape index: {}]
  %s9 = inlined_call_operand.<no memory space> [shape: f32[1,1], index: 9, kind: input, shape index: {}]
  %s10 = inlined_call_operand.vmem [shape: f32[2,1], index: 10, kind: output, shape index: {}]
  %s11 = sld [smem:[#allocation0]]
  $region50: #{liangwei_forward.1} parent=0
    _
  %s13 = ssub.s32 1, %s11
  %s14 = scalar_select 0, %s13, %s11
  %v15 = vstv %s9
  %16 = vst [vmem:[#allocation2] sm:$0x1] %v15
  // Predicated region
  $region2: #{liangwei_forward.1} parent=0 // pred_check
    _
  $region3: #{liangwei_forward.1} parent=0 // pred_check_branch
    %18 = sbr.rel (0) target = $region5
  $region4: #{liangwei_forward.1} parent=0 // pred_region
    _
  $region5: #{liangwei_forward.1} parent=0 // pred_fallthru
    _
  // Predicated region
  $region6: #{liangwei_forward.1} parent=0 // pred_check
    _
  $region7: #{liangwei_forward.1} parent=0 // pred_check_branch
    %20 = sbr.rel (0) target = $region9
  $region8: #{liangwei_forward.1} parent=0 // pred_region
    _
  $region9: #{liangwei_forward.1} parent=0 // pred_fallthru
    _
  // Predicated region
  $region10: #{liangwei_forward.1} parent=0 // pred_check
    _
  $region11: #{liangwei_forward.1} parent=0 // pred_check_branch
    %22 = sbr.rel (0) target = $region13
  $region12: #{liangwei_forward.1} parent=0 // pred_region
    _
  $region13: #{liangwei_forward.1} parent=0 // pred_fallthru
    _
  // Predicated region
  $region14: #{liangwei_forward.1} parent=0 // pred_check
    _
  $region15: #{liangwei_forward.1} parent=0 // pred_check_branch
    %24 = sbr.rel (0) target = $region17
  $region16: #{liangwei_forward.1} parent=0 // pred_region
    _
  $region17: #{liangwei_forward.1} parent=0 // pred_fallthru
    _
  // Predicated region
  $region18: #{liangwei_forward.1} parent=0 // pred_check
    _
  $region19: #{liangwei_forward.1} parent=0 // pred_check_branch
    %26 = sbr.rel (0) target = $region21
  $region20: #{liangwei_forward.1} parent=0 // pred_region
    _
  $region21: #{liangwei_forward.1} parent=0 // pred_fallthru
    _
  // Predicated region
  $region22: #{liangwei_forward.1} parent=0 // pred_check
    _
  $region23: #{liangwei_forward.1} parent=0 // pred_check_branch
    %28 = sbr.rel (0) target = $region25
  $region24: #{liangwei_forward.1} parent=0 // pred_region
    _
  $region25: #{liangwei_forward.1} parent=0 // pred_fallthru
    _
  // Predicated region
  $region26: #{liangwei_forward.1} parent=0 // pred_check
    _
  $region27: #{liangwei_forward.1} parent=0 // pred_check_branch
    %30 = sbr.rel (0) target = $region29
  $region28: #{liangwei_forward.1} parent=0 // pred_region
    _
  $region29: #{liangwei_forward.1} parent=0 // pred_fallthru
    _
  // Predicated region
  $region30: #{liangwei_forward.1} parent=0 // pred_check
    _
  $region31: #{liangwei_forward.1} parent=0 // pred_check_branch
    %32 = sbr.rel (0) target = $region33
  $region32: #{liangwei_forward.1} parent=0 // pred_region
    _
  $region33: #{liangwei_forward.1} parent=0 // pred_fallthru
    _
  // Predicated region
  $region34: #{liangwei_forward.1} parent=0 // pred_check
    _
  $region35: #{liangwei_forward.1} parent=0 // pred_check_branch
    %34 = sbr.rel (0) target = $region37
  $region36: #{liangwei_forward.1} parent=0 // pred_region
    _
  $region37: #{liangwei_forward.1} parent=0 // pred_fallthru
    _
  // Predicated region
  $region38: #{liangwei_forward.1} parent=0 // pred_check
    _
  $region39: #{liangwei_forward.1} parent=0 // pred_check_branch
    %36 = sbr.rel (0) target = $region41
  $region40: #{liangwei_forward.1} parent=0 // pred_region
    _
  $region41: #{liangwei_forward.1} parent=0 // pred_fallthru
    _
  %v37 = vld [vmem:[%s0] sm:$0xff]
  %v38 = vld [vmem:[%s0 + $0x8] sm:$0xff]
  %v39 = vld [vmem:[%s0 + $0x10] sm:$0xff]
  %v40 = vld [vmem:[%s0 + $0x18] sm:$0xff]
  %v41 = vld [vmem:[%s0 + $0x20] sm:$0xff]
  %v42 = vld [vmem:[%s0 + $0x28] sm:$0xff]
  %v43 = vld [vmem:[%s0 + $0x30] sm:$0xff]
  %v44 = vld [vmem:[%s0 + $0x38] sm:$0xff]
  %vm51 = vcmask 1046528
  %v52 = vrot.slane %v37, 1
  %v53 = vrot.slane %v38, 1
  %v54 = vsel %vm51, %v52, %v53
  %v55 = vrot.slane %v39, 1
  %v56 = vsel %vm51, %v53, %v55
  %v57 = vrot.slane %v41, 1
  %v58 = vrot.slane %v42, 1
  %v59 = vsel %vm51, %v57, %v58
  %v60 = vrot.slane %v43, 1
  %v61 = vsel %vm51, %v58, %v60
  %62 = vrot.lane.b32.xlu0 %v54, 4
  %v63 = vpop.permute.xlu0 %62
  %64 = vrot.lane.b32.xlu0 %v56, 4
  %v65 = vpop.permute.xlu0 %64
  %66 = vrot.lane.b32.xlu0 %v55, 4
  %v67 = vpop.permute.xlu0 %66
  %68 = vrot.lane.b32.xlu0 %v59, 4
  %v69 = vpop.permute.xlu0 %68
  %70 = vrot.lane.b32.xlu0 %v61, 4
  %v71 = vpop.permute.xlu0 %70
  %72 = vrot.lane.b32.xlu0 %v60, 4
  %v73 = vpop.permute.xlu0 %72
  %vm80 = vcmask 1045504
  %v81 = vrot.slane %v37, 2
  %v82 = vrot.slane %v38, 2
  %v83 = vsel %vm80, %v81, %v82
  %v84 = vrot.slane %v39, 2
  %v85 = vsel %vm80, %v82, %v84
  %v86 = vrot.slane %v41, 2
  %v87 = vrot.slane %v42, 2
  %v88 = vsel %vm80, %v86, %v87
  %v89 = vrot.slane %v43, 2
  %v90 = vsel %vm80, %v87, %v89
  %91 = vrot.lane.b32.xlu0 %v83, 8
  %v92 = vpop.permute.xlu0 %91
  %93 = vrot.lane.b32.xlu0 %v85, 8
  %v94 = vpop.permute.xlu0 %93
  %95 = vrot.lane.b32.xlu0 %v84, 8
  %v96 = vpop.permute.xlu0 %95
  %97 = vrot.lane.b32.xlu0 %v88, 8
  %v98 = vpop.permute.xlu0 %97
  %99 = vrot.lane.b32.xlu0 %v90, 8
  %v100 = vpop.permute.xlu0 %99
  %101 = vrot.lane.b32.xlu0 %v89, 8
  %v102 = vpop.permute.xlu0 %101
  %vm109 = vcmask 1044480
  %v110 = vrot.slane %v37, 3
  %v111 = vrot.slane %v38, 3
  %v112 = vsel %vm109, %v110, %v111
  %v113 = vrot.slane %v39, 3
  %v114 = vsel %vm109, %v111, %v113
  %v115 = vrot.slane %v41, 3
  %v116 = vrot.slane %v42, 3
  %v117 = vsel %vm109, %v115, %v116
  %v118 = vrot.slane %v43, 3
  %v119 = vsel %vm109, %v116, %v118
  %120 = vrot.lane.b32.xlu0 %v112, 12
  %v121 = vpop.permute.xlu0 %120
  %122 = vrot.lane.b32.xlu0 %v114, 12
  %v123 = vpop.permute.xlu0 %122
  %124 = vrot.lane.b32.xlu0 %v113, 12
  %v125 = vpop.permute.xlu0 %124
  %126 = vrot.lane.b32.xlu0 %v117, 12
  %v127 = vpop.permute.xlu0 %126
  %128 = vrot.lane.b32.xlu0 %v119, 12
  %v129 = vpop.permute.xlu0 %128
  %130 = vrot.lane.b32.xlu0 %v118, 12
  %v131 = vpop.permute.xlu0 %130
  %vm138 = vcmask 1043456
  %v139 = vrot.slane %v37, 4
  %v140 = vrot.slane %v38, 4
  %v141 = vsel %vm138, %v139, %v140
  %v142 = vrot.slane %v39, 4
  %v143 = vsel %vm138, %v140, %v142
  %v144 = vrot.slane %v41, 4
  %v145 = vrot.slane %v42, 4
  %v146 = vsel %vm138, %v144, %v145
  %v147 = vrot.slane %v43, 4
  %v148 = vsel %vm138, %v145, %v147
  %149 = vrot.lane.b32.xlu0 %v141, 16
  %v150 = vpop.permute.xlu0 %149
  %151 = vrot.lane.b32.xlu0 %v143, 16
  %v152 = vpop.permute.xlu0 %151
  %153 = vrot.lane.b32.xlu0 %v142, 16
  %v154 = vpop.permute.xlu0 %153
  %155 = vrot.lane.b32.xlu0 %v146, 16
  %v156 = vpop.permute.xlu0 %155
  %157 = vrot.lane.b32.xlu0 %v148, 16
  %v158 = vpop.permute.xlu0 %157
  %159 = vrot.lane.b32.xlu0 %v147, 16
  %v160 = vpop.permute.xlu0 %159
  %vm167 = vcmask 1042432
  %v168 = vrot.slane %v37, 5
  %v169 = vrot.slane %v38, 5
  %v170 = vsel %vm167, %v168, %v169
  %v171 = vrot.slane %v39, 5
  %v172 = vsel %vm167, %v169, %v171
  %v173 = vrot.slane %v41, 5
  %v174 = vrot.slane %v42, 5
  %v175 = vsel %vm167, %v173, %v174
  %v176 = vrot.slane %v43, 5
  %v177 = vsel %vm167, %v174, %v176
  %178 = vrot.lane.b32.xlu0 %v170, 20
  %v179 = vpop.permute.xlu0 %178
  %180 = vrot.lane.b32.xlu0 %v172, 20
  %v181 = vpop.permute.xlu0 %180
  %182 = vrot.lane.b32.xlu0 %v171, 20
  %v183 = vpop.permute.xlu0 %182
  %184 = vrot.lane.b32.xlu0 %v175, 20
  %v185 = vpop.permute.xlu0 %184
  %186 = vrot.lane.b32.xlu0 %v177, 20
  %v187 = vpop.permute.xlu0 %186
  %188 = vrot.lane.b32.xlu0 %v176, 20
  %v189 = vpop.permute.xlu0 %188
  %vm196 = vcmask 1041408
  %v197 = vrot.slane %v37, 6
  %v198 = vrot.slane %v38, 6
  %v199 = vsel %vm196, %v197, %v198
  %v200 = vrot.slane %v39, 6
  %v201 = vsel %vm196, %v198, %v200
  %v202 = vrot.slane %v41, 6
  %v203 = vrot.slane %v42, 6
  %v204 = vsel %vm196, %v202, %v203
  %v205 = vrot.slane %v43, 6
  %v206 = vsel %vm196, %v203, %v205
  %207 = vrot.lane.b32.xlu0 %v199, 24
  %v208 = vpop.permute.xlu0 %207
  %209 = vrot.lane.b32.xlu0 %v201, 24
  %v210 = vpop.permute.xlu0 %209
  %211 = vrot.lane.b32.xlu0 %v200, 24
  %v212 = vpop.permute.xlu0 %211
  %213 = vrot.lane.b32.xlu0 %v204, 24
  %v214 = vpop.permute.xlu0 %213
  %215 = vrot.lane.b32.xlu0 %v206, 24
  %v216 = vpop.permute.xlu0 %215
  %217 = vrot.lane.b32.xlu0 %v205, 24
  %v218 = vpop.permute.xlu0 %217
  %vm225 = vcmask 1040384
  %v226 = vrot.slane %v37, 7
  %v227 = vrot.slane %v38, 7
  %v228 = vsel %vm225, %v226, %v227
  %v229 = vrot.slane %v39, 7
  %v230 = vsel %vm225, %v227, %v229
  %v231 = vrot.slane %v41, 7
  %v232 = vrot.slane %v42, 7
  %v233 = vsel %vm225, %v231, %v232
  %v234 = vrot.slane %v43, 7
  %v235 = vsel %vm225, %v232, %v234
  %236 = vrot.lane.b32.xlu0 %v228, 28
  %v237 = vpop.permute.xlu0 %236
  %238 = vrot.lane.b32.xlu0 %v230, 28
  %v239 = vpop.permute.xlu0 %238
  %240 = vrot.lane.b32.xlu0 %v229, 28
  %v241 = vpop.permute.xlu0 %240
  %242 = vrot.lane.b32.xlu0 %v233, 28
  %v243 = vpop.permute.xlu0 %242
  %244 = vrot.lane.b32.xlu0 %v235, 28
  %v245 = vpop.permute.xlu0 %244
  %246 = vrot.lane.b32.xlu0 %v234, 28
  %v247 = vpop.permute.xlu0 %246
  %256 = vrot.lane.b32.xlu0 %v38, 32
  %v257 = vpop.permute.xlu0 %256
  %258 = vrot.lane.b32.xlu0 %v39, 32
  %v259 = vpop.permute.xlu0 %258
  %260 = vrot.lane.b32.xlu0 %v40, 32
  %v261 = vpop.permute.xlu0 %260
  %262 = vrot.lane.b32.xlu0 %v42, 32
  %v263 = vpop.permute.xlu0 %262
  %264 = vrot.lane.b32.xlu0 %v43, 32
  %v265 = vpop.permute.xlu0 %264
  %266 = vrot.lane.b32.xlu0 %v44, 32
  %v267 = vpop.permute.xlu0 %266
  %v274 = vrot.slane %v40, 1
  %v275 = vsel %vm51, %v55, %v274
  %v276 = vrot.slane %v44, 1
  %v277 = vsel %vm51, %v60, %v276
  %278 = vrot.lane.b32.xlu0 %v56, 36
  %v279 = vpop.permute.xlu0 %278
  %280 = vrot.lane.b32.xlu0 %v275, 36
  %v281 = vpop.permute.xlu0 %280
  %282 = vrot.lane.b32.xlu0 %v274, 36
  %v283 = vpop.permute.xlu0 %282
  %284 = vrot.lane.b32.xlu0 %v61, 36
  %v285 = vpop.permute.xlu0 %284
  %286 = vrot.lane.b32.xlu0 %v277, 36
  %v287 = vpop.permute.xlu0 %286
  %288 = vrot.lane.b32.xlu0 %v276, 36
  %v289 = vpop.permute.xlu0 %288
  %v296 = vrot.slane %v40, 2
  %v297 = vsel %vm80, %v84, %v296
  %v298 = vrot.slane %v44, 2
  %v299 = vsel %vm80, %v89, %v298
  %300 = vrot.lane.b32.xlu0 %v85, 40
  %v301 = vpop.permute.xlu0 %300
  %302 = vrot.lane.b32.xlu0 %v297, 40
  %v303 = vpop.permute.xlu0 %302
  %304 = vrot.lane.b32.xlu0 %v296, 40
  %v305 = vpop.permute.xlu0 %304
  %306 = vrot.lane.b32.xlu0 %v90, 40
  %v307 = vpop.permute.xlu0 %306
  %308 = vrot.lane.b32.xlu0 %v299, 40
  %v309 = vpop.permute.xlu0 %308
  %310 = vrot.lane.b32.xlu0 %v298, 40
  %v311 = vpop.permute.xlu0 %310
  %v318 = vrot.slane %v40, 3
  %v319 = vsel %vm109, %v113, %v318
  %v320 = vrot.slane %v44, 3
  %v321 = vsel %vm109, %v118, %v320
  %322 = vrot.lane.b32.xlu0 %v114, 44
  %v323 = vpop.permute.xlu0 %322
  %324 = vrot.lane.b32.xlu0 %v319, 44
  %v325 = vpop.permute.xlu0 %324
  %326 = vrot.lane.b32.xlu0 %v318, 44
  %v327 = vpop.permute.xlu0 %326
  %328 = vrot.lane.b32.xlu0 %v119, 44
  %v329 = vpop.permute.xlu0 %328
  %330 = vrot.lane.b32.xlu0 %v321, 44
  %v331 = vpop.permute.xlu0 %330
  %332 = vrot.lane.b32.xlu0 %v320, 44
  %v333 = vpop.permute.xlu0 %332
  %v340 = vrot.slane %v40, 4
  %v341 = vsel %vm138, %v142, %v340
  %v342 = vrot.slane %v44, 4
  %v343 = vsel %vm138, %v147, %v342
  %344 = vrot.lane.b32.xlu0 %v143, 48
  %v345 = vpop.permute.xlu0 %344
  %346 = vrot.lane.b32.xlu0 %v341, 48
  %v347 = vpop.permute.xlu0 %346
  %348 = vrot.lane.b32.xlu0 %v340, 48
  %v349 = vpop.permute.xlu0 %348
  %350 = vrot.lane.b32.xlu0 %v148, 48
  %v351 = vpop.permute.xlu0 %350
  %352 = vrot.lane.b32.xlu0 %v343, 48
  %v353 = vpop.permute.xlu0 %352
  %354 = vrot.lane.b32.xlu0 %v342, 48
  %v355 = vpop.permute.xlu0 %354
  %v362 = vrot.slane %v40, 5
  %v363 = vsel %vm167, %v171, %v362
  %v364 = vrot.slane %v44, 5
  %v365 = vsel %vm167, %v176, %v364
  %366 = vrot.lane.b32.xlu0 %v172, 52
  %v367 = vpop.permute.xlu0 %366
  %368 = vrot.lane.b32.xlu0 %v363, 52
  %v369 = vpop.permute.xlu0 %368
  %370 = vrot.lane.b32.xlu0 %v362, 52
  %v371 = vpop.permute.xlu0 %370
  %372 = vrot.lane.b32.xlu0 %v177, 52
  %v373 = vpop.permute.xlu0 %372
  %374 = vrot.lane.b32.xlu0 %v365, 52
  %v375 = vpop.permute.xlu0 %374
  %376 = vrot.lane.b32.xlu0 %v364, 52
  %v377 = vpop.permute.xlu0 %376
  %v384 = vrot.slane %v40, 6
  %v385 = vsel %vm196, %v200, %v384
  %v386 = vrot.slane %v44, 6
  %v387 = vsel %vm196, %v205, %v386
  %388 = vrot.lane.b32.xlu0 %v201, 56
  %v389 = vpop.permute.xlu0 %388
  %390 = vrot.lane.b32.xlu0 %v385, 56
  %v391 = vpop.permute.xlu0 %390
  %392 = vrot.lane.b32.xlu0 %v384, 56
  %v393 = vpop.permute.xlu0 %392
  %394 = vrot.lane.b32.xlu0 %v206, 56
  %v395 = vpop.permute.xlu0 %394
  %396 = vrot.lane.b32.xlu0 %v387, 56
  %v397 = vpop.permute.xlu0 %396
  %398 = vrot.lane.b32.xlu0 %v386, 56
  %v399 = vpop.permute.xlu0 %398
  %v406 = vrot.slane %v40, 7
  %v407 = vsel %vm225, %v229, %v406
  %v408 = vrot.slane %v44, 7
  %v409 = vsel %vm225, %v234, %v408
  %410 = vrot.lane.b32.xlu0 %v230, 60
  %v411 = vpop.permute.xlu0 %410
  %412 = vrot.lane.b32.xlu0 %v407, 60
  %v413 = vpop.permute.xlu0 %412
  %414 = vrot.lane.b32.xlu0 %v406, 60
  %v415 = vpop.permute.xlu0 %414
  %416 = vrot.lane.b32.xlu0 %v235, 60
  %v417 = vpop.permute.xlu0 %416
  %418 = vrot.lane.b32.xlu0 %v409, 60
  %v419 = vpop.permute.xlu0 %418
  %420 = vrot.lane.b32.xlu0 %v408, 60
  %v421 = vpop.permute.xlu0 %420
  %vm428 = vcmask 31744
  %v429 = vsel %vm428, %v37, %v63
  %v430 = vsel %vm428, %v38, %v65
  %v431 = vsel %vm428, %v39, %v67
  %v432 = vsel %vm428, %v41, %v69
  %v433 = vsel %vm428, %v42, %v71
  %v434 = vsel %vm428, %v43, %v73
  %vm435 = vcmask 64512
  %v436 = vsel %vm435, %v429, %v92
  %v437 = vsel %vm435, %v430, %v94
  %v438 = vsel %vm435, %v431, %v96
  %v439 = vsel %vm435, %v432, %v98
  %v440 = vsel %vm435, %v433, %v100
  %v441 = vsel %vm435, %v434, %v102
  %vm442 = vcmask 97280
  %v443 = vsel %vm442, %v436, %v121
  %v444 = vsel %vm442, %v437, %v123
  %v445 = vsel %vm442, %v438, %v125
  %v446 = vsel %vm442, %v439, %v127
  %v447 = vsel %vm442, %v440, %v129
  %v448 = vsel %vm442, %v441, %v131
  %vm449 = vcmask 130048
  %v450 = vsel %vm449, %v443, %v150
  %v451 = vsel %vm449, %v444, %v152
  %v452 = vsel %vm449, %v445, %v154
  %v453 = vsel %vm449, %v446, %v156
  %v454 = vsel %vm449, %v447, %v158
  %v455 = vsel %vm449, %v448, %v160
  %vm456 = vcmask 162816
  %v457 = vsel %vm456, %v450, %v179
  %v458 = vsel %vm456, %v451, %v181
  %v459 = vsel %vm456, %v452, %v183
  %v460 = vsel %vm456, %v453, %v185
  %v461 = vsel %vm456, %v454, %v187
  %v462 = vsel %vm456, %v455, %v189
  %vm463 = vcmask 195584
  %v464 = vsel %vm463, %v457, %v208
  %v465 = vsel %vm463, %v458, %v210
  %v466 = vsel %vm463, %v459, %v212
  %v467 = vsel %vm463, %v460, %v214
  %v468 = vsel %vm463, %v461, %v216
  %v469 = vsel %vm463, %v462, %v218
  %vm470 = vcmask 228352
  %v471 = vsel %vm470, %v464, %v237
  %v472 = vsel %vm470, %v465, %v239
  %v473 = vsel %vm470, %v466, %v241
  %v474 = vsel %vm470, %v467, %v243
  %v475 = vsel %vm470, %v468, %v245
  %v476 = vsel %vm470, %v469, %v247
  %vm477 = vcmask 261120
  %v478 = vsel %vm477, %v471, %v257
  %v479 = vsel %vm477, %v472, %v259
  %v480 = vsel %vm477, %v473, %v261
  %v481 = vsel %vm477, %v474, %v263
  %v482 = vsel %vm477, %v475, %v265
  %v483 = vsel %vm477, %v476, %v267
  %vm484 = vcmask 293888
  %v485 = vsel %vm484, %v478, %v279
  %v486 = vsel %vm484, %v479, %v281
  %v487 = vsel %vm484, %v480, %v283
  %v488 = vsel %vm484, %v481, %v285
  %v489 = vsel %vm484, %v482, %v287
  %v490 = vsel %vm484, %v483, %v289
  %vm491 = vcmask 326656
  %v492 = vsel %vm491, %v485, %v301
  %v493 = vsel %vm491, %v486, %v303
  %v494 = vsel %vm491, %v487, %v305
  %v495 = vsel %vm491, %v488, %v307
  %v496 = vsel %vm491, %v489, %v309
  %v497 = vsel %vm491, %v490, %v311
  %vm498 = vcmask 359424
  %v499 = vsel %vm498, %v492, %v323
  %v500 = vsel %vm498, %v493, %v325
  %v501 = vsel %vm498, %v494, %v327
  %v502 = vsel %vm498, %v495, %v329
  %v503 = vsel %vm498, %v496, %v331
  %v504 = vsel %vm498, %v497, %v333
  %vm505 = vcmask 392192
  %v506 = vsel %vm505, %v499, %v345
  %v507 = vsel %vm505, %v500, %v347
  %v508 = vsel %vm505, %v501, %v349
  %v509 = vsel %vm505, %v502, %v351
  %v510 = vsel %vm505, %v503, %v353
  %v511 = vsel %vm505, %v504, %v355
  %vm512 = vcmask 424960
  %v513 = vsel %vm512, %v506, %v367
  %v514 = vsel %vm512, %v507, %v369
  %v515 = vsel %vm512, %v508, %v371
  %v516 = vsel %vm512, %v509, %v373
  %v517 = vsel %vm512, %v510, %v375
  %v518 = vsel %vm512, %v511, %v377
  %vm519 = vcmask 457728
  %v520 = vsel %vm519, %v513, %v389
  %v521 = vsel %vm519, %v514, %v391
  %v522 = vsel %vm519, %v515, %v393
  %v523 = vsel %vm519, %v516, %v395
  %v524 = vsel %vm519, %v517, %v397
  %v525 = vsel %vm519, %v518, %v399
  %vm526 = vcmask 490496
  %v527 = vsel %vm526, %v520, %v411
  %v528 = vsel %vm526, %v521, %v413
  %v529 = vsel %vm526, %v522, %v415
  %v530 = vsel %vm526, %v523, %v417
  %v531 = vsel %vm526, %v524, %v419
  %v532 = vsel %vm526, %v525, %v421
  %v533 = vld [vmem:[%s1] sm:$0xff]
  %v534 = vld [vmem:[%s1 + $0x8] sm:$0xff]
  %v535 = vld [vmem:[%s1 + $0x10] sm:$0xff]
  %v536 = vld [vmem:[%s1 + $0x18] sm:$0xff]
  %v537 = vld [vmem:[%s1 + $0x20] sm:$0xff]
  %v538 = vld [vmem:[%s1 + $0x28] sm:$0xff]
  %v539 = vld [vmem:[%s1 + $0x30] sm:$0xff]
  %v540 = vld [vmem:[%s1 + $0x38] sm:$0xff]
  %v541 = vld [vmem:[%s2] sm:$0x1]
  %v543 = vperm.slane %v541, 0
  %v550 = vrot.slane %v527, 1
  %v551 = vrot.slane %v527, 2
  %v552 = vrot.slane %v527, 3
  %v553 = vrot.slane %v527, 4
  %v554 = vrot.slane %v527, 5
  %v555 = vrot.slane %v527, 6
  %v556 = vrot.slane %v527, 7
  %v557 = vrot.slane %v528, 1
  %v558 = vrot.slane %v528, 2
  %v559 = vrot.slane %v528, 3
  %v560 = vrot.slane %v528, 4
  %v561 = vrot.slane %v528, 5
  %v562 = vrot.slane %v528, 6
  %v563 = vrot.slane %v528, 7
  %v564 = vrot.slane %v530, 1
  %v565 = vrot.slane %v530, 2
  %v566 = vrot.slane %v530, 3
  %v567 = vrot.slane %v530, 4
  %v568 = vrot.slane %v530, 5
  %v569 = vrot.slane %v530, 6
  %v570 = vrot.slane %v530, 7
  %v571 = vrot.slane %v531, 1
  %v572 = vrot.slane %v531, 2
  %v573 = vrot.slane %v531, 3
  %v574 = vrot.slane %v531, 4
  %v575 = vrot.slane %v531, 5
  %v576 = vrot.slane %v531, 6
  %v577 = vrot.slane %v531, 7
  %v578 = vrot.slane %v543, 1
  %v579 = vrot.slane %v543, 2
  %v580 = vrot.slane %v543, 3
  %v581 = vrot.slane %v543, 4
  %v582 = vrot.slane %v543, 5
  %v583 = vrot.slane %v543, 6
  %v584 = vrot.slane %v543, 7
  %585 = vst [vmem:[#allocation1] ss:$9 sm:$0xff] %v527
  %s586 = scalar_lea.vmem [#allocation1], 1
  %587 = vst [vmem:[%s586] ss:$9 sm:$0xff] %v550
  %s588 = scalar_lea.vmem [#allocation1], 2
  %589 = vst [vmem:[%s588] ss:$9 sm:$0xff] %v551
  %s590 = scalar_lea.vmem [#allocation1], 3
  %591 = vst [vmem:[%s590] ss:$9 sm:$0xff] %v552
  %s592 = scalar_lea.vmem [#allocation1], 4
  %593 = vst [vmem:[%s592] ss:$9 sm:$0xff] %v553
  %s594 = scalar_lea.vmem [#allocation1], 5
  %595 = vst [vmem:[%s594] ss:$9 sm:$0xff] %v554
  %s596 = scalar_lea.vmem [#allocation1], 6
  %597 = vst [vmem:[%s596] ss:$9 sm:$0xff] %v555
  %s598 = scalar_lea.vmem [#allocation1], 7
  %599 = vst [vmem:[%s598] ss:$9 sm:$0xff] %v556
  %v600 = vld [vmem:[#allocation1] sm:$0xff]
  %601 = vst [vmem:[#allocation1] ss:$9 sm:$0xff] %v528
  %602 = vst [vmem:[%s586] ss:$9 sm:$0xff] %v557
  %603 = vst [vmem:[%s588] ss:$9 sm:$0xff] %v558
  %604 = vst [vmem:[%s590] ss:$9 sm:$0xff] %v559
  %605 = vst [vmem:[%s592] ss:$9 sm:$0xff] %v560
  %606 = vst [vmem:[%s594] ss:$9 sm:$0xff] %v561
  %607 = vst [vmem:[%s596] ss:$9 sm:$0xff] %v562
  %608 = vst [vmem:[%s598] ss:$9 sm:$0xff] %v563
  %v609 = vld [vmem:[#allocation1] sm:$0xff]
  %610 = vst [vmem:[#allocation1] ss:$9 sm:$0xff] %v529
  %611 = vst [vmem:[%s586] ss:$9 sm:$0xff] %v530
  %612 = vst [vmem:[%s588] ss:$9 sm:$0xff] %v564
  %613 = vst [vmem:[%s590] ss:$9 sm:$0xff] %v565
  %614 = vst [vmem:[%s592] ss:$9 sm:$0xff] %v566
  %615 = vst [vmem:[%s594] ss:$9 sm:$0xff] %v567
  %616 = vst [vmem:[%s596] ss:$9 sm:$0xff] %v568
  %617 = vst [vmem:[%s598] ss:$9 sm:$0xff] %v569
  %v618 = vld [vmem:[#allocation1] sm:$0xff]
  %619 = vst [vmem:[#allocation1] ss:$9 sm:$0xff] %v570
  %620 = vst [vmem:[%s586] ss:$9 sm:$0xff] %v531
  %621 = vst [vmem:[%s588] ss:$9 sm:$0xff] %v571
  %622 = vst [vmem:[%s590] ss:$9 sm:$0xff] %v572
  %623 = vst [vmem:[%s592] ss:$9 sm:$0xff] %v573
  %624 = vst [vmem:[%s594] ss:$9 sm:$0xff] %v574
  %625 = vst [vmem:[%s596] ss:$9 sm:$0xff] %v575
  %626 = vst [vmem:[%s598] ss:$9 sm:$0xff] %v576
  %v627 = vld [vmem:[#allocation1] sm:$0xff]
  %628 = vst [vmem:[#allocation1] ss:$9 sm:$0xff] %v577
  %629 = vst [vmem:[%s586] ss:$9 sm:$0xff] %v532
  %v630 = vld [vmem:[#allocation1] sm:$0xff]
  %631 = vst [vmem:[#allocation1] ss:$9 sm:$0xff] %v543
  %s632 = scalar_lea.vmem [#allocation1], 1
  %633 = vst [vmem:[%s632] ss:$9 sm:$0xff] %v578
  %s634 = scalar_lea.vmem [#allocation1], 2
  %635 = vst [vmem:[%s634] ss:$9 sm:$0xff] %v579
  %s636 = scalar_lea.vmem [#allocation1], 3
  %637 = vst [vmem:[%s636] ss:$9 sm:$0xff] %v580
  %s638 = scalar_lea.vmem [#allocation1], 4
  %639 = vst [vmem:[%s638] ss:$9 sm:$0xff] %v581
  %s640 = scalar_lea.vmem [#allocation1], 5
  %641 = vst [vmem:[%s640] ss:$9 sm:$0xff] %v582
  %s642 = scalar_lea.vmem [#allocation1], 6
  %643 = vst [vmem:[%s642] ss:$9 sm:$0xff] %v583
  %s644 = scalar_lea.vmem [#allocation1], 7
  %645 = vst [vmem:[%s644] ss:$9 sm:$0xff] %v584
  %v646 = vld [vmem:[#allocation1] sm:$0xff]
  %647 = vst [vmem:[#allocation1] ss:$9 sm:$0xff] %v543
  %648 = vst [vmem:[%s632] ss:$9 sm:$0xff] %v578
  %649 = vst [vmem:[%s634] ss:$9 sm:$0xff] %v579
  %650 = vst [vmem:[%s636] ss:$9 sm:$0xff] %v580
  %651 = vst [vmem:[%s638] ss:$9 sm:$0xff] %v581
  %652 = vst [vmem:[%s640] ss:$9 sm:$0xff] %v582
  %653 = vst [vmem:[%s642] ss:$9 sm:$0xff] %v583
  %654 = vst [vmem:[%s644] ss:$9 sm:$0xff] %v584
  %v655 = vld [vmem:[#allocation1] sm:$0xff]
  %656 = vst [vmem:[#allocation1] ss:$9 sm:$0xff] %v543
  %657 = vst [vmem:[%s632] ss:$9 sm:$0xff] %v543
  %658 = vst [vmem:[%s634] ss:$9 sm:$0xff] %v578
  %659 = vst [vmem:[%s636] ss:$9 sm:$0xff] %v579
  %660 = vst [vmem:[%s638] ss:$9 sm:$0xff] %v580
  %661 = vst [vmem:[%s640] ss:$9 sm:$0xff] %v581
  %662 = vst [vmem:[%s642] ss:$9 sm:$0xff] %v582
  %663 = vst [vmem:[%s644] ss:$9 sm:$0xff] %v583
  %v664 = vld [vmem:[#allocation1] sm:$0xff]
  %665 = vst [vmem:[#allocation1] ss:$9 sm:$0xff] %v584
  %666 = vst [vmem:[%s632] ss:$9 sm:$0xff] %v543
  %667 = vst [vmem:[%s634] ss:$9 sm:$0xff] %v578
  %668 = vst [vmem:[%s636] ss:$9 sm:$0xff] %v579
  %669 = vst [vmem:[%s638] ss:$9 sm:$0xff] %v580
  %670 = vst [vmem:[%s640] ss:$9 sm:$0xff] %v581
  %671 = vst [vmem:[%s642] ss:$9 sm:$0xff] %v582
  %672 = vst [vmem:[%s644] ss:$9 sm:$0xff] %v583
  %v673 = vld [vmem:[#allocation1] sm:$0xff]
  %674 = vst [vmem:[#allocation1] ss:$9 sm:$0xff] %v584
  %675 = vst [vmem:[%s632] ss:$9 sm:$0xff] %v543
  %v676 = vld [vmem:[#allocation1] sm:$0xff]
  %vm682 = vcmask 523264
  %v683 = vsel %vm682, %v600, 0
  %v685 = vsel %vm682, %v609, 0
  %v687 = vsel %vm682, %v618, 0
  %v689 = vsel %vm682, %v627, 0
  %v691 = vsel %vm682, %v630, 0
  %693 = vmatpush.msra.mxu0 0.0
  %694 = vmatpush.msra.mxu0 0.0
  %695 = vmatpush.msra.mxu0 0.0
  %696 = vmatpush.msra.mxu0 0.0
  %697 = vmatpush.msra.mxu0 0.0
  %698 = vmatpush.msra.mxu0 0.0
  %699 = vmatpush.msra.mxu0 0.0
  %700 = vmatpush.msra.mxu0 0.0
  %701 = vmatpush.msra.mxu0 %v540
  %702 = vmatpush.msra.mxu0 %v539
  %703 = vmatpush.msra.mxu0 %v538
  %704 = vmatpush.msra.mxu0 %v537
  %705 = vmatpush.msra.mxu0 %v536
  %706 = vmatpush.msra.mxu0 %v535
  %707 = vmatpush.msra.mxu0 %v534
  %708 = vmatpush.msra.mxu0 %v533
  %709 = vmatmul.f32.gmra.mxu0 %v683
  %v710 = vpop.f32.mrf.mxu0
  %v711 = vadd.f32 %v646, %v710
  %712 = vmatmul.f32.gmra.mxu0 %v685
  %v713 = vpop.f32.mrf.mxu0
  %v714 = vadd.f32 %v655, %v713
  %715 = vmatmul.f32.gmra.mxu0 %v687
  %v716 = vpop.f32.mrf.mxu0
  %v717 = vadd.f32 %v664, %v716
  %718 = vmatmul.f32.gmra.mxu0 %v689
  %v719 = vpop.f32.mrf.mxu0
  %v720 = vadd.f32 %v673, %v719
  %721 = vmatmul.f32.gmra.mxu0 %v691
  %v722 = vpop.f32.mrf.mxu0
  %v723 = vadd.f32 %v676, %v722
  %724 = vdwg.mxu0
  %v730 = vrot.slane %v711, 1
  %v731 = vrot.slane %v711, 2
  %v732 = vrot.slane %v711, 3
  %v733 = vrot.slane %v711, 4
  %v734 = vrot.slane %v711, 5
  %v735 = vrot.slane %v711, 6
  %v736 = vrot.slane %v711, 7
  %v737 = vrot.slane %v714, 1
  %v738 = vrot.slane %v714, 2
  %v739 = vrot.slane %v714, 3
  %v740 = vrot.slane %v714, 4
  %v741 = vrot.slane %v714, 5
  %v742 = vrot.slane %v714, 6
  %v743 = vrot.slane %v714, 7
  %v744 = vrot.slane %v717, 1
  %v745 = vrot.slane %v717, 2
  %v746 = vrot.slane %v717, 3
  %v747 = vrot.slane %v717, 4
  %v748 = vrot.slane %v717, 5
  %v749 = vrot.slane %v717, 6
  %v750 = vrot.slane %v717, 7
  %v751 = vrot.slane %v720, 1
  %v752 = vrot.slane %v720, 2
  %v753 = vrot.slane %v720, 3
  %v754 = vrot.slane %v720, 4
  %v755 = vrot.slane %v720, 5
  %v756 = vrot.slane %v720, 6
  %v757 = vrot.slane %v720, 7
  %758 = vst [vmem:[#allocation1] ss:$9 sm:$0xff] %v711
  %s759 = scalar_lea.vmem [#allocation1], 1
  %760 = vst [vmem:[%s759] ss:$9 sm:$0xff] %v730
  %s761 = scalar_lea.vmem [#allocation1], 2
  %762 = vst [vmem:[%s761] ss:$9 sm:$0xff] %v731
  %s763 = scalar_lea.vmem [#allocation1], 3
  %764 = vst [vmem:[%s763] ss:$9 sm:$0xff] %v732
  %v765 = vld [vmem:[#allocation1] sm:$0xff]
  %766 = vst [vmem:[#allocation1] ss:$9 sm:$0xff] %v744
  %767 = vst [vmem:[%s759] ss:$9 sm:$0xff] %v745
  %768 = vst [vmem:[%s761] ss:$9 sm:$0xff] %v746
  %769 = vst [vmem:[%s763] ss:$9 sm:$0xff] %v747
  %v770 = vld [vmem:[#allocation1] sm:$0xff]
  %vm773 = vcmask 191488
  %v774 = vsel %vm773, %v765, -inf
  %v775 = vrot.slane %v774, 4
  %v776 = vmax.f32 %v774, %v775
  %v777 = vrot.slane %v776, 2
  %v778 = vmax.f32 %v776, %v777
  %v779 = vrot.slane %v778, 1
  %v780 = vmax.f32 %v778, %v779
  %v781 = vsel %vm773, %v770, -inf
  %v782 = vrot.slane %v781, 4
  %v783 = vmax.f32 %v781, %v782
  %v784 = vrot.slane %v783, 2
  %v785 = vmax.f32 %v783, %v784
  %v786 = vrot.slane %v785, 1
  %v787 = vmax.f32 %v785, %v786
  %788 = vst [vmem:[#allocation1] ss:$9 sm:$0xff] %v733
  %s789 = scalar_lea.vmem [#allocation1], 1
  %790 = vst [vmem:[%s789] ss:$9 sm:$0xff] %v734
  %s791 = scalar_lea.vmem [#allocation1], 2
  %792 = vst [vmem:[%s791] ss:$9 sm:$0xff] %v735
  %s793 = scalar_lea.vmem [#allocation1], 3
  %794 = vst [vmem:[%s793] ss:$9 sm:$0xff] %v736
  %v795 = vld [vmem:[#allocation1] sm:$0xff]
  %796 = vst [vmem:[#allocation1] ss:$9 sm:$0xff] %v748
  %797 = vst [vmem:[%s789] ss:$9 sm:$0xff] %v749
  %798 = vst [vmem:[%s791] ss:$9 sm:$0xff] %v750
  %799 = vst [vmem:[%s793] ss:$9 sm:$0xff] %v720
  %v800 = vld [vmem:[#allocation1] sm:$0xff]
  %v803 = vsel %vm773, %v795, -inf
  %v804 = vrot.slane %v803, 4
  %v805 = vmax.f32 %v803, %v804
  %v806 = vrot.slane %v805, 2
  %v807 = vmax.f32 %v805, %v806
  %v808 = vrot.slane %v807, 1
  %v809 = vmax.f32 %v807, %v808
  %v810 = vsel %vm773, %v800, -inf
  %v811 = vrot.slane %v810, 4
  %v812 = vmax.f32 %v810, %v811
  %v813 = vrot.slane %v812, 2
  %v814 = vmax.f32 %v812, %v813
  %v815 = vrot.slane %v814, 1
  %v816 = vmax.f32 %v814, %v815
  %817 = vst [vmem:[#allocation1] ss:$9 sm:$0xff] %v714
  %s818 = scalar_lea.vmem [#allocation1], 1
  %819 = vst [vmem:[%s818] ss:$9 sm:$0xff] %v737
  %s820 = scalar_lea.vmem [#allocation1], 2
  %821 = vst [vmem:[%s820] ss:$9 sm:$0xff] %v738
  %s822 = scalar_lea.vmem [#allocation1], 3
  %823 = vst [vmem:[%s822] ss:$9 sm:$0xff] %v739
  %v824 = vld [vmem:[#allocation1] sm:$0xff]
  %825 = vst [vmem:[#allocation1] ss:$9 sm:$0xff] %v751
  %826 = vst [vmem:[%s818] ss:$9 sm:$0xff] %v752
  %827 = vst [vmem:[%s820] ss:$9 sm:$0xff] %v753
  %828 = vst [vmem:[%s822] ss:$9 sm:$0xff] %v754
  %v829 = vld [vmem:[#allocation1] sm:$0xff]
  %v832 = vsel %vm773, %v824, -inf
  %v833 = vrot.slane %v832, 4
  %v834 = vmax.f32 %v832, %v833
  %v835 = vrot.slane %v834, 2
  %v836 = vmax.f32 %v834, %v835
  %v837 = vrot.slane %v836, 1
  %v838 = vmax.f32 %v836, %v837
  %v839 = vsel %vm773, %v829, -inf
  %v840 = vrot.slane %v839, 4
  %v841 = vmax.f32 %v839, %v840
  %v842 = vrot.slane %v841, 2
  %v843 = vmax.f32 %v841, %v842
  %v844 = vrot.slane %v843, 1
  %v845 = vmax.f32 %v843, %v844
  %846 = vst [vmem:[#allocation1] ss:$9 sm:$0xff] %v740
  %s847 = scalar_lea.vmem [#allocation1], 1
  %848 = vst [vmem:[%s847] ss:$9 sm:$0xff] %v741
  %s849 = scalar_lea.vmem [#allocation1], 2
  %850 = vst [vmem:[%s849] ss:$9 sm:$0xff] %v742
  %s851 = scalar_lea.vmem [#allocation1], 3
  %852 = vst [vmem:[%s851] ss:$9 sm:$0xff] %v743
  %v853 = vld [vmem:[#allocation1] sm:$0xff]
  %854 = vst [vmem:[#allocation1] ss:$9 sm:$0xff] %v755
  %855 = vst [vmem:[%s847] ss:$9 sm:$0xff] %v756
  %856 = vst [vmem:[%s849] ss:$9 sm:$0xff] %v757
  %857 = vst [vmem:[%s851] ss:$9 sm:$0xff] %v723
  %v858 = vld [vmem:[#allocation1] sm:$0xff]
  %v861 = vsel %vm773, %v853, -inf
  %v862 = vrot.slane %v861, 4
  %v863 = vmax.f32 %v861, %v862
  %v864 = vrot.slane %v863, 2
  %v865 = vmax.f32 %v863, %v864
  %v866 = vrot.slane %v865, 1
  %v867 = vmax.f32 %v865, %v866
  %v868 = vsel %vm773, %v858, -inf
  %v869 = vrot.slane %v868, 4
  %v870 = vmax.f32 %v868, %v869
  %v871 = vrot.slane %v870, 2
  %v872 = vmax.f32 %v870, %v871
  %v873 = vrot.slane %v872, 1
  %v874 = vmax.f32 %v872, %v873
  %v875 = vsel %vm225, %v780, %v809
  %v876 = vsel %vm225, %v787, %v816
  %v877 = vsel %vm196, %v875, %v838
  %v878 = vsel %vm196, %v876, %v845
  %v879 = vsel %vm167, %v877, %v867
  %v880 = vsel %vm167, %v878, %v874
  %v881 = vld [vmem:[%s3] sm:$0xff]
  %v882 = vld [vmem:[%s3 + $0x8] sm:$0xff]
  %v883 = vld [vmem:[%s3 + $0x10] sm:$0xff]
  %v884 = vld [vmem:[%s5] sm:$0x1]
  %v886 = vperm.slane %v884, 0
  %889 = vst [vmem:[#allocation1] ss:$2 sm:$0xff] %v879
  %s890 = scalar_lea.vmem [#allocation1], 1
  %891 = vst [vmem:[%s890] ss:$2 sm:$0xff] %v880
  %v892 = vld.sshfl [vmem:[#allocation1] sm:$0xff pattern:$0x75316420]
  %893 = vst [vmem:[#allocation1] ss:$2 sm:$0xff] %v886
  %s894 = scalar_lea.vmem [#allocation1], 1
  %895 = vst [vmem:[%s894] ss:$2 sm:$0xff] %v886
  %v896 = vld.sshfl [vmem:[#allocation1] sm:$0xff pattern:$0x75316420]
  %v898 = vsel %vm463, %v892, 0
  %900 = vmatpush.msra.mxu0 0.0
  %901 = vmatpush.msra.mxu0 0.0
  %902 = vmatpush.msra.mxu0 0.0
  %903 = vmatpush.msra.mxu0 0.0
  %904 = vmatpush.msra.mxu0 0.0
  %905 = vmatpush.msra.mxu0 0.0
  %906 = vmatpush.msra.mxu0 0.0
  %907 = vmatpush.msra.mxu0 0.0
  %908 = vmatpush.msra.mxu0 0.0
  %909 = vmatpush.msra.mxu0 0.0
  %910 = vmatpush.msra.mxu0 0.0
  %911 = vmatpush.msra.mxu0 0.0
  %912 = vmatpush.msra.mxu0 0.0
  %913 = vmatpush.msra.mxu0 %v883
  %914 = vmatpush.msra.mxu0 %v882
  %915 = vmatpush.msra.mxu0 %v881
  %916 = vmatmul.f32.gmra.mxu0 %v898
  %v917 = vpop.f32.mrf.mxu0
  %v918 = vadd.f32 %v896, %v917
  %919 = vdwg.mxu0
  %v921 = vrot.slane %v918, 4
  %v923 = vld [vmem:[%s4] sm:$0xff]
  %v924 = vld [vmem:[%s4 + $0x8] sm:$0xff]
  %v925 = vld [vmem:[%s4 + $0x10] sm:$0xff]
  %v926 = vld [vmem:[%s4 + $0x18] sm:$0xff]
  %v928 = vsel %vm477, 0.0, 0
  %930 = vmatpush.msra.mxu0 0.0
  %931 = vmatpush.msra.mxu0 0.0
  %932 = vmatpush.msra.mxu0 0.0
  %933 = vmatpush.msra.mxu0 0.0
  %934 = vmatpush.msra.mxu0 0.0
  %935 = vmatpush.msra.mxu0 0.0
  %936 = vmatpush.msra.mxu0 0.0
  %937 = vmatpush.msra.mxu0 0.0
  %938 = vmatpush.msra.mxu0 0.0
  %939 = vmatpush.msra.mxu0 0.0
  %940 = vmatpush.msra.mxu0 0.0
  %941 = vmatpush.msra.mxu0 0.0
  %942 = vmatpush.msra.mxu0 %v926
  %943 = vmatpush.msra.mxu0 %v925
  %944 = vmatpush.msra.mxu0 %v924
  %945 = vmatpush.msra.mxu0 %v923
  %946 = vmatmul.f32.gmra.mxu0 %v928
  %v947 = vpop.f32.mrf.mxu0
  %v948 = vadd.f32 0.0, %v947
  %949 = vdwg.mxu0
  %v951 = vrot.slane %v948, 1
  %v954 = vadd.f32 %v918, %v948
  %v955 = vadd.f32 %v921, %v951
  %v956 = vxor.u32 %v954, 2147483648
  %v957 = vxor.u32 %v955, 2147483648
  %v958 = vmul.f32 %v956, 1.442695
  %v959 = vpow.pop %v958
  %v960 = vmul.f32 %v957, 1.442695
  %v961 = vpow.pop %v960
  %v962 = vadd.f32 %v959, 1.0
  %v963 = vadd.f32 %v961, 1.0
  %v964 = vrcp.pop %v962
  %v965 = vmul.f32 %v962, %v964
  %v966 = vsub.f32 1.0, %v965
  %v967 = vmul.f32 %v964, %v966
  %v968 = vadd.f32 %v964, %v967
  %vm969 = vweird.f32 %v962
  %vm970 = vweird.f32 %v964
  %vm971 = vmor %vm969, %vm970
  %v972 = vsel %vm971, %v964, %v968
  %v973 = vand.u32 2147483647, %v962
  %vm974 = vcmp.eq.f32.partialorder %v973, 8.507059e+37
  %v975 = vand.u32 %v962, 2147483648
  %v976 = vor.u32 1.1754944e-38, %v975
  %v977 = vsel %vm974, %v976, %v972
  %v978 = vmul.f32 1.0, %v977
  %v979 = vrcp.pop %v963
  %v980 = vmul.f32 %v963, %v979
  %v981 = vsub.f32 1.0, %v980
  %v982 = vmul.f32 %v979, %v981
  %v983 = vadd.f32 %v979, %v982
  %vm984 = vweird.f32 %v963
  %vm985 = vweird.f32 %v979
  %vm986 = vmor %vm984, %vm985
  %v987 = vsel %vm986, %v979, %v983
  %v988 = vand.u32 2147483647, %v963
  %vm989 = vcmp.eq.f32.partialorder %v988, 8.507059e+37
  %v990 = vand.u32 %v963, 2147483648
  %v991 = vor.u32 1.1754944e-38, %v990
  %v992 = vsel %vm989, %v991, %v987
  %v993 = vmul.f32 1.0, %v992
  %v994 = vtanh.pop %v954
  %v995 = vtanh.pop %v955
  %v996 = vmul.f32 %v978, 0.0
  %v997 = vmul.f32 %v993, 0.0
  %1000 = vrot.lane.b32.xlu0 %v994, 64
  %v1001 = vpop.permute.xlu0 %1000
  %1002 = vrot.lane.b32.xlu0 %v995, 64
  %v1003 = vpop.permute.xlu0 %1002
  %v1006 = vmul.f32 %v978, %v1001
  %v1007 = vmul.f32 %v993, %v1003
  %1010 = vrot.lane.b32.xlu0 %v1006, 32
  %v1011 = vpop.permute.xlu0 %1010
  %1012 = vrot.lane.b32.xlu0 %v1007, 32
  %v1013 = vpop.permute.xlu0 %1012
  %v1016 = vadd.f32 %v996, %v1011
  %v1017 = vadd.f32 %v997, %v1013
  %v1018 = vtanh.pop %v1016
  %v1019 = vtanh.pop %v1017
  %1022 = vrot.lane.b32.xlu0 %v1018, 64
  %v1023 = vpop.permute.xlu0 %1022
  %1024 = vrot.lane.b32.xlu0 %v1019, 64
  %v1025 = vpop.permute.xlu0 %1024
  %v1028 = vmul.f32 %v978, %v1023
  %v1029 = vmul.f32 %v993, %v1025
  %v1032 = vperm.slane %v1028, 0
  %v1033 = vperm.slane %v1029, 0
  %vm1034 = vcmask 1041409
  %v1035 = vsel %vm1034, %v1033, %v1032
  %1036 = vrot.lane.b32.xlu0 %v1035, 32
  %v1037 = vpop.permute.xlu0 %1036
  %v1039 = vsel %vm477, %v1037, 0.0
  %v1040 = vld [vmem:[%s6] sm:$0xff]
  %v1041 = vld [vmem:[%s6 + $0x8] sm:$0xff]
  %v1042 = vld [vmem:[%s6 + $0x10] sm:$0xff]
  %v1043 = vld [vmem:[%s6 + $0x18] sm:$0xff]
  %v1044 = vld [vmem:[%s6 + $0x20] sm:$0xff]
  %v1045 = vld [vmem:[%s6 + $0x28] sm:$0xff]
  %v1046 = vld [vmem:[%s6 + $0x30] sm:$0xff]
  %v1047 = vld [vmem:[%s6 + $0x38] sm:$0xff]
  %v1048 = vld [vmem:[%s7] sm:$0x1]
  %v1050 = vperm.slane %v1048, 0
  %v1053 = vsel %vm682, %v1039, 0
  %1055 = vmatpush.msra.mxu0 0.0
  %1056 = vmatpush.msra.mxu0 0.0
  %1057 = vmatpush.msra.mxu0 0.0
  %1058 = vmatpush.msra.mxu0 0.0
  %1059 = vmatpush.msra.mxu0 0.0
  %1060 = vmatpush.msra.mxu0 0.0
  %1061 = vmatpush.msra.mxu0 0.0
  %1062 = vmatpush.msra.mxu0 0.0
  %1063 = vmatpush.msra.mxu0 %v1047
  %1064 = vmatpush.msra.mxu0 %v1046
  %1065 = vmatpush.msra.mxu0 %v1045
  %1066 = vmatpush.msra.mxu0 %v1044
  %1067 = vmatpush.msra.mxu0 %v1043
  %1068 = vmatpush.msra.mxu0 %v1042
  %1069 = vmatpush.msra.mxu0 %v1041
  %1070 = vmatpush.msra.mxu0 %v1040
  %1071 = vmatmul.f32.gmra.mxu0 %v1053
  %v1072 = vpop.f32.mrf.mxu0
  %v1073 = vadd.f32 %v1050, %v1072
  %1074 = vdwg.mxu0
  %v1075 = vxor.u32 %v1073, 2147483648
  %v1076 = vmul.f32 %v1075, 1.442695
  %v1077 = vpow.pop %v1076
  %v1078 = vadd.f32 %v1077, 1.0
  %v1079 = vrcp.pop %v1078
  %v1080 = vmul.f32 %v1078, %v1079
  %v1081 = vsub.f32 1.0, %v1080
  %v1082 = vmul.f32 %v1079, %v1081
  %v1083 = vadd.f32 %v1079, %v1082
  %vm1084 = vweird.f32 %v1078
  %vm1085 = vweird.f32 %v1079
  %vm1086 = vmor %vm1084, %vm1085
  %v1087 = vsel %vm1086, %v1079, %v1083
  %v1088 = vand.u32 2147483647, %v1078
  %vm1089 = vcmp.eq.f32.partialorder %v1088, 8.507059e+37
  %v1090 = vand.u32 %v1078, 2147483648
  %v1091 = vor.u32 1.1754944e-38, %v1090
  %v1092 = vsel %vm1089, %v1091, %v1087
  %v1093 = vmul.f32 1.0, %v1092
  %v1094 = vtanh.pop %v1073
  %v1095 = vmul.f32 %v1093, 0.0
  %1097 = vrot.lane.b32.xlu0 %v1094, 64
  %v1098 = vpop.permute.xlu0 %1097
  %v1100 = vmul.f32 %v1093, %v1098
  %1102 = vrot.lane.b32.xlu0 %v1100, 32
  %v1103 = vpop.permute.xlu0 %1102
  %v1105 = vadd.f32 %v1095, %v1103
  %v1106 = vtanh.pop %v1105
  %1108 = vrot.lane.b32.xlu0 %v1106, 64
  %v1109 = vpop.permute.xlu0 %1108
  %v1111 = vmul.f32 %v1093, %v1109
  %v1112 = vadd.f32 %v1111, 0.0
  %v1113 = vsel %vm477, %v1037, 0
  %1115 = vmatpush.msra.mxu0 0.0
  %1116 = vmatpush.msra.mxu0 0.0
  %1117 = vmatpush.msra.mxu0 0.0
  %1118 = vmatpush.msra.mxu0 0.0
  %1119 = vmatpush.msra.mxu0 0.0
  %1120 = vmatpush.msra.mxu0 0.0
  %1121 = vmatpush.msra.mxu0 0.0
  %1122 = vmatpush.msra.mxu0 0.0
  %1123 = vmatpush.msra.mxu0 0.0
  %1124 = vmatpush.msra.mxu0 0.0
  %1125 = vmatpush.msra.mxu0 0.0
  %1126 = vmatpush.msra.mxu0 0.0
  %1127 = vmatpush.msra.mxu0 %v926
  %1128 = vmatpush.msra.mxu0 %v925
  %1129 = vmatpush.msra.mxu0 %v924
  %1130 = vmatpush.msra.mxu0 %v923
  %1131 = vmatmul.f32.gmra.mxu0 %v1113
  %v1132 = vpop.f32.mrf.mxu0
  %v1133 = vadd.f32 0.0, %v1132
  %1134 = vdwg.mxu0
  %v1136 = vrot.slane %v1133, 7
  %v1139 = vadd.f32 %v918, %v1136
  %v1140 = vadd.f32 %v921, %v1133
  %v1141 = vxor.u32 %v1139, 2147483648
  %v1142 = vxor.u32 %v1140, 2147483648
  %v1143 = vmul.f32 %v1141, 1.442695
  %v1144 = vpow.pop %v1143
  %v1145 = vmul.f32 %v1142, 1.442695
  %v1146 = vpow.pop %v1145
  %v1147 = vadd.f32 %v1144, 1.0
  %v1148 = vadd.f32 %v1146, 1.0
  %v1149 = vrcp.pop %v1147
  %v1150 = vmul.f32 %v1147, %v1149
  %v1151 = vsub.f32 1.0, %v1150
  %v1152 = vmul.f32 %v1149, %v1151
  %v1153 = vadd.f32 %v1149, %v1152
  %vm1154 = vweird.f32 %v1147
  %vm1155 = vweird.f32 %v1149
  %vm1156 = vmor %vm1154, %vm1155
  %v1157 = vsel %vm1156, %v1149, %v1153
  %v1158 = vand.u32 2147483647, %v1147
  %vm1159 = vcmp.eq.f32.partialorder %v1158, 8.507059e+37
  %v1160 = vand.u32 %v1147, 2147483648
  %v1161 = vor.u32 1.1754944e-38, %v1160
  %v1162 = vsel %vm1159, %v1161, %v1157
  %v1163 = vmul.f32 1.0, %v1162
  %v1164 = vrcp.pop %v1148
  %v1165 = vmul.f32 %v1148, %v1164
  %v1166 = vsub.f32 1.0, %v1165
  %v1167 = vmul.f32 %v1164, %v1166
  %v1168 = vadd.f32 %v1164, %v1167
  %vm1169 = vweird.f32 %v1148
  %vm1170 = vweird.f32 %v1164
  %vm1171 = vmor %vm1169, %vm1170
  %v1172 = vsel %vm1171, %v1164, %v1168
  %v1173 = vand.u32 2147483647, %v1148
  %vm1174 = vcmp.eq.f32.partialorder %v1173, 8.507059e+37
  %v1175 = vand.u32 %v1148, 2147483648
  %v1176 = vor.u32 1.1754944e-38, %v1175
  %v1177 = vsel %vm1174, %v1176, %v1172
  %v1178 = vmul.f32 1.0, %v1177
  %v1179 = vtanh.pop %v1139
  %v1180 = vtanh.pop %v1140
  %v1183 = vrot.slane %v1016, 7
  %v1184 = vrot.slane %v1017, 7
  %v1187 = vmul.f32 %v1163, %v1183
  %v1188 = vmul.f32 %v1178, %v1184
  %1191 = vrot.lane.b32.xlu0 %v1179, 64
  %v1192 = vpop.permute.xlu0 %1191
  %1193 = vrot.lane.b32.xlu0 %v1180, 64
  %v1194 = vpop.permute.xlu0 %1193
  %v1197 = vmul.f32 %v1163, %v1192
  %v1198 = vmul.f32 %v1178, %v1194
  %1201 = vrot.lane.b32.xlu0 %v1197, 32
  %v1202 = vpop.permute.xlu0 %1201
  %1203 = vrot.lane.b32.xlu0 %v1198, 32
  %v1204 = vpop.permute.xlu0 %1203
  %v1207 = vadd.f32 %v1187, %v1202
  %v1208 = vadd.f32 %v1188, %v1204
  %v1209 = vtanh.pop %v1207
  %v1210 = vtanh.pop %v1208
  %1213 = vrot.lane.b32.xlu0 %v1209, 64
  %v1214 = vpop.permute.xlu0 %1213
  %1215 = vrot.lane.b32.xlu0 %v1210, 64
  %v1216 = vpop.permute.xlu0 %1215
  %v1219 = vmul.f32 %v1163, %v1214
  %v1220 = vmul.f32 %v1178, %v1216
  %v1223 = vperm.slane %v1219, 1
  %v1224 = vperm.slane %v1220, 1
  %vm1225 = vcmask 1042434
  %v1226 = vsel %vm1225, %v1224, %v1223
  %1227 = vrot.lane.b32.xlu0 %v1226, 32
  %v1228 = vpop.permute.xlu0 %1227
  %v1231 = vrot.slane %v1111, 7
  %1232 = vrot.lane.b32.xlu0 %v1231, 64
  %v1233 = vpop.permute.xlu0 %1232
  %v1235 = vsel %vm477, %v1228, %v1233
  %v1237 = vrot.slane %v1235, 1
  %v1238 = vsel %vm682, %v1237, 0
  %1240 = vmatpush.msra.mxu0 0.0
  %1241 = vmatpush.msra.mxu0 0.0
  %1242 = vmatpush.msra.mxu0 0.0
  %1243 = vmatpush.msra.mxu0 0.0
  %1244 = vmatpush.msra.mxu0 0.0
  %1245 = vmatpush.msra.mxu0 0.0
  %1246 = vmatpush.msra.mxu0 0.0
  %1247 = vmatpush.msra.mxu0 0.0
  %1248 = vmatpush.msra.mxu0 %v1047
  %1249 = vmatpush.msra.mxu0 %v1046
  %1250 = vmatpush.msra.mxu0 %v1045
  %1251 = vmatpush.msra.mxu0 %v1044
  %1252 = vmatpush.msra.mxu0 %v1043
  %1253 = vmatpush.msra.mxu0 %v1042
  %1254 = vmatpush.msra.mxu0 %v1041
  %1255 = vmatpush.msra.mxu0 %v1040
  %1256 = vmatmul.f32.gmra.mxu0 %v1238
  %v1257 = vpop.f32.mrf.mxu0
  %v1258 = vadd.f32 %v1050, %v1257
  %1259 = vdwg.mxu0
  %v1260 = vxor.u32 %v1258, 2147483648
  %v1261 = vmul.f32 %v1260, 1.442695
  %v1262 = vpow.pop %v1261
  %v1263 = vadd.f32 %v1262, 1.0
  %v1264 = vrcp.pop %v1263
  %v1265 = vmul.f32 %v1263, %v1264
  %v1266 = vsub.f32 1.0, %v1265
  %v1267 = vmul.f32 %v1264, %v1266
  %v1268 = vadd.f32 %v1264, %v1267
  %vm1269 = vweird.f32 %v1263
  %vm1270 = vweird.f32 %v1264
  %vm1271 = vmor %vm1269, %vm1270
  %v1272 = vsel %vm1271, %v1264, %v1268
  %v1273 = vand.u32 2147483647, %v1263
  %vm1274 = vcmp.eq.f32.partialorder %v1273, 8.507059e+37
  %v1275 = vand.u32 %v1263, 2147483648
  %v1276 = vor.u32 1.1754944e-38, %v1275
  %v1277 = vsel %vm1274, %v1276, %v1272
  %v1278 = vmul.f32 1.0, %v1277
  %v1279 = vtanh.pop %v1258
  %v1280 = vmul.f32 %v1278, %v1105
  %1282 = vrot.lane.b32.xlu0 %v1279, 64
  %v1283 = vpop.permute.xlu0 %1282
  %v1285 = vmul.f32 %v1278, %v1283
  %1287 = vrot.lane.b32.xlu0 %v1285, 32
  %v1288 = vpop.permute.xlu0 %1287
  %v1290 = vadd.f32 %v1280, %v1288
  %v1291 = vtanh.pop %v1290
  %1293 = vrot.lane.b32.xlu0 %v1291, 64
  %v1294 = vpop.permute.xlu0 %1293
  %v1296 = vmul.f32 %v1278, %v1294
  %v1297 = vadd.f32 %v1112, %v1296
  %v1298 = vsel %vm1034, %v1224, %v1223
  %1299 = vrot.lane.b32.xlu0 %v1298, 32
  %v1300 = vpop.permute.xlu0 %1299
  %v1301 = vsel %vm477, %v1300, 0
  %1303 = vmatpush.msra.mxu0 0.0
  %1304 = vmatpush.msra.mxu0 0.0
  %1305 = vmatpush.msra.mxu0 0.0
  %1306 = vmatpush.msra.mxu0 0.0
  %1307 = vmatpush.msra.mxu0 0.0
  %1308 = vmatpush.msra.mxu0 0.0
  %1309 = vmatpush.msra.mxu0 0.0
  %1310 = vmatpush.msra.mxu0 0.0
  %1311 = vmatpush.msra.mxu0 0.0
  %1312 = vmatpush.msra.mxu0 0.0
  %1313 = vmatpush.msra.mxu0 0.0
  %1314 = vmatpush.msra.mxu0 0.0
  %1315 = vmatpush.msra.mxu0 %v926
  %1316 = vmatpush.msra.mxu0 %v925
  %1317 = vmatpush.msra.mxu0 %v924
  %1318 = vmatpush.msra.mxu0 %v923
  %1319 = vmatmul.f32.gmra.mxu0 %v1301
  %v1320 = vpop.f32.mrf.mxu0
  %v1321 = vadd.f32 0.0, %v1320
  %1322 = vdwg.mxu0
  %v1324 = vrot.slane %v1321, 6
  %v1325 = vrot.slane %v1321, 7
  %v1328 = vadd.f32 %v918, %v1324
  %v1329 = vadd.f32 %v921, %v1325
  %v1330 = vxor.u32 %v1328, 2147483648
  %v1331 = vxor.u32 %v1329, 2147483648
  %v1332 = vmul.f32 %v1330, 1.442695
  %v1333 = vpow.pop %v1332
  %v1334 = vmul.f32 %v1331, 1.442695
  %v1335 = vpow.pop %v1334
  %v1336 = vadd.f32 %v1333, 1.0
  %v1337 = vadd.f32 %v1335, 1.0
  %v1338 = vrcp.pop %v1336
  %v1339 = vmul.f32 %v1336, %v1338
  %v1340 = vsub.f32 1.0, %v1339
  %v1341 = vmul.f32 %v1338, %v1340
  %v1342 = vadd.f32 %v1338, %v1341
  %vm1343 = vweird.f32 %v1336
  %vm1344 = vweird.f32 %v1338
  %vm1345 = vmor %vm1343, %vm1344
  %v1346 = vsel %vm1345, %v1338, %v1342
  %v1347 = vand.u32 2147483647, %v1336
  %vm1348 = vcmp.eq.f32.partialorder %v1347, 8.507059e+37
  %v1349 = vand.u32 %v1336, 2147483648
  %v1350 = vor.u32 1.1754944e-38, %v1349
  %v1351 = vsel %vm1348, %v1350, %v1346
  %v1352 = vmul.f32 1.0, %v1351
  %v1353 = vrcp.pop %v1337
  %v1354 = vmul.f32 %v1337, %v1353
  %v1355 = vsub.f32 1.0, %v1354
  %v1356 = vmul.f32 %v1353, %v1355
  %v1357 = vadd.f32 %v1353, %v1356
  %vm1358 = vweird.f32 %v1337
  %vm1359 = vweird.f32 %v1353
  %vm1360 = vmor %vm1358, %vm1359
  %v1361 = vsel %vm1360, %v1353, %v1357
  %v1362 = vand.u32 2147483647, %v1337
  %vm1363 = vcmp.eq.f32.partialorder %v1362, 8.507059e+37
  %v1364 = vand.u32 %v1337, 2147483648
  %v1365 = vor.u32 1.1754944e-38, %v1364
  %v1366 = vsel %vm1363, %v1365, %v1361
  %v1367 = vmul.f32 1.0, %v1366
  %v1368 = vtanh.pop %v1328
  %v1369 = vtanh.pop %v1329
  %v1372 = vrot.slane %v1207, 7
  %v1373 = vrot.slane %v1208, 7
  %v1376 = vmul.f32 %v1352, %v1372
  %v1377 = vmul.f32 %v1367, %v1373
  %1380 = vrot.lane.b32.xlu0 %v1368, 64
  %v1381 = vpop.permute.xlu0 %1380
  %1382 = vrot.lane.b32.xlu0 %v1369, 64
  %v1383 = vpop.permute.xlu0 %1382
  %v1386 = vmul.f32 %v1352, %v1381
  %v1387 = vmul.f32 %v1367, %v1383
  %1390 = vrot.lane.b32.xlu0 %v1386, 32
  %v1391 = vpop.permute.xlu0 %1390
  %1392 = vrot.lane.b32.xlu0 %v1387, 32
  %v1393 = vpop.permute.xlu0 %1392
  %v1396 = vadd.f32 %v1376, %v1391
  %v1397 = vadd.f32 %v1377, %v1393
  %v1398 = vtanh.pop %v1396
  %v1399 = vtanh.pop %v1397
  %1402 = vrot.lane.b32.xlu0 %v1398, 64
  %v1403 = vpop.permute.xlu0 %1402
  %1404 = vrot.lane.b32.xlu0 %v1399, 64
  %v1405 = vpop.permute.xlu0 %1404
  %v1408 = vmul.f32 %v1352, %v1403
  %v1409 = vmul.f32 %v1367, %v1405
  %v1412 = vperm.slane %v1408, 2
  %v1413 = vperm.slane %v1409, 2
  %vm1414 = vcmask 1043459
  %v1415 = vsel %vm1414, %v1413, %v1412
  %1416 = vrot.lane.b32.xlu0 %v1415, 32
  %v1417 = vpop.permute.xlu0 %1416
  %v1420 = vrot.slane %v1296, 6
  %1421 = vrot.lane.b32.xlu0 %v1420, 64
  %v1422 = vpop.permute.xlu0 %1421
  %v1424 = vsel %vm477, %v1417, %v1422
  %v1426 = vrot.slane %v1424, 2
  %v1427 = vsel %vm682, %v1426, 0
  %1429 = vmatpush.msra.mxu0 0.0
  %1430 = vmatpush.msra.mxu0 0.0
  %1431 = vmatpush.msra.mxu0 0.0
  %1432 = vmatpush.msra.mxu0 0.0
  %1433 = vmatpush.msra.mxu0 0.0
  %1434 = vmatpush.msra.mxu0 0.0
  %1435 = vmatpush.msra.mxu0 0.0
  %1436 = vmatpush.msra.mxu0 0.0
  %1437 = vmatpush.msra.mxu0 %v1047
  %1438 = vmatpush.msra.mxu0 %v1046
  %1439 = vmatpush.msra.mxu0 %v1045
  %1440 = vmatpush.msra.mxu0 %v1044
  %1441 = vmatpush.msra.mxu0 %v1043
  %1442 = vmatpush.msra.mxu0 %v1042
  %1443 = vmatpush.msra.mxu0 %v1041
  %1444 = vmatpush.msra.mxu0 %v1040
  %1445 = vmatmul.f32.gmra.mxu0 %v1427
  %v1446 = vpop.f32.mrf.mxu0
  %v1447 = vadd.f32 %v1050, %v1446
  %1448 = vdwg.mxu0
  %v1449 = vxor.u32 %v1447, 2147483648
  %v1450 = vmul.f32 %v1449, 1.442695
  %v1451 = vpow.pop %v1450
  %v1452 = vadd.f32 %v1451, 1.0
  %v1453 = vrcp.pop %v1452
  %v1454 = vmul.f32 %v1452, %v1453
  %v1455 = vsub.f32 1.0, %v1454
  %v1456 = vmul.f32 %v1453, %v1455
  %v1457 = vadd.f32 %v1453, %v1456
  %vm1458 = vweird.f32 %v1452
  %vm1459 = vweird.f32 %v1453
  %vm1460 = vmor %vm1458, %vm1459
  %v1461 = vsel %vm1460, %v1453, %v1457
  %v1462 = vand.u32 2147483647, %v1452
  %vm1463 = vcmp.eq.f32.partialorder %v1462, 8.507059e+37
  %v1464 = vand.u32 %v1452, 2147483648
  %v1465 = vor.u32 1.1754944e-38, %v1464
  %v1466 = vsel %vm1463, %v1465, %v1461
  %v1467 = vmul.f32 1.0, %v1466
  %v1468 = vtanh.pop %v1447
  %v1469 = vmul.f32 %v1467, %v1290
  %1471 = vrot.lane.b32.xlu0 %v1468, 64
  %v1472 = vpop.permute.xlu0 %1471
  %v1474 = vmul.f32 %v1467, %v1472
  %1476 = vrot.lane.b32.xlu0 %v1474, 32
  %v1477 = vpop.permute.xlu0 %1476
  %v1479 = vadd.f32 %v1469, %v1477
  %v1480 = vtanh.pop %v1479
  %1482 = vrot.lane.b32.xlu0 %v1480, 64
  %v1483 = vpop.permute.xlu0 %1482
  %v1485 = vmul.f32 %v1467, %v1483
  %v1486 = vadd.f32 %v1297, %v1485
  %v1487 = vsel %vm1034, %v1413, %v1412
  %1488 = vrot.lane.b32.xlu0 %v1487, 32
  %v1489 = vpop.permute.xlu0 %1488
  %v1490 = vsel %vm477, %v1489, 0
  %1492 = vmatpush.msra.mxu0 0.0
  %1493 = vmatpush.msra.mxu0 0.0
  %1494 = vmatpush.msra.mxu0 0.0
  %1495 = vmatpush.msra.mxu0 0.0
  %1496 = vmatpush.msra.mxu0 0.0
  %1497 = vmatpush.msra.mxu0 0.0
  %1498 = vmatpush.msra.mxu0 0.0
  %1499 = vmatpush.msra.mxu0 0.0
  %1500 = vmatpush.msra.mxu0 0.0
  %1501 = vmatpush.msra.mxu0 0.0
  %1502 = vmatpush.msra.mxu0 0.0
  %1503 = vmatpush.msra.mxu0 0.0
  %1504 = vmatpush.msra.mxu0 %v926
  %1505 = vmatpush.msra.mxu0 %v925
  %1506 = vmatpush.msra.mxu0 %v924
  %1507 = vmatpush.msra.mxu0 %v923
  %1508 = vmatmul.f32.gmra.mxu0 %v1490
  %v1509 = vpop.f32.mrf.mxu0
  %v1510 = vadd.f32 0.0, %v1509
  %1511 = vdwg.mxu0
  %v1513 = vrot.slane %v1510, 5
  %v1514 = vrot.slane %v1510, 6
  %v1517 = vadd.f32 %v918, %v1513
  %v1518 = vadd.f32 %v921, %v1514
  %v1519 = vxor.u32 %v1517, 2147483648
  %v1520 = vxor.u32 %v1518, 2147483648
  %v1521 = vmul.f32 %v1519, 1.442695
  %v1522 = vpow.pop %v1521
  %v1523 = vmul.f32 %v1520, 1.442695
  %v1524 = vpow.pop %v1523
  %v1525 = vadd.f32 %v1522, 1.0
  %v1526 = vadd.f32 %v1524, 1.0
  %v1527 = vrcp.pop %v1525
  %v1528 = vmul.f32 %v1525, %v1527
  %v1529 = vsub.f32 1.0, %v1528
  %v1530 = vmul.f32 %v1527, %v1529
  %v1531 = vadd.f32 %v1527, %v1530
  %vm1532 = vweird.f32 %v1525
  %vm1533 = vweird.f32 %v1527
  %vm1534 = vmor %vm1532, %vm1533
  %v1535 = vsel %vm1534, %v1527, %v1531
  %v1536 = vand.u32 2147483647, %v1525
  %vm1537 = vcmp.eq.f32.partialorder %v1536, 8.507059e+37
  %v1538 = vand.u32 %v1525, 2147483648
  %v1539 = vor.u32 1.1754944e-38, %v1538
  %v1540 = vsel %vm1537, %v1539, %v1535
  %v1541 = vmul.f32 1.0, %v1540
  %v1542 = vrcp.pop %v1526
  %v1543 = vmul.f32 %v1526, %v1542
  %v1544 = vsub.f32 1.0, %v1543
  %v1545 = vmul.f32 %v1542, %v1544
  %v1546 = vadd.f32 %v1542, %v1545
  %vm1547 = vweird.f32 %v1526
  %vm1548 = vweird.f32 %v1542
  %vm1549 = vmor %vm1547, %vm1548
  %v1550 = vsel %vm1549, %v1542, %v1546
  %v1551 = vand.u32 2147483647, %v1526
  %vm1552 = vcmp.eq.f32.partialorder %v1551, 8.507059e+37
  %v1553 = vand.u32 %v1526, 2147483648
  %v1554 = vor.u32 1.1754944e-38, %v1553
  %v1555 = vsel %vm1552, %v1554, %v1550
  %v1556 = vmul.f32 1.0, %v1555
  %v1557 = vtanh.pop %v1517
  %v1558 = vtanh.pop %v1518
  %v1561 = vrot.slane %v1396, 7
  %v1562 = vrot.slane %v1397, 7
  %v1565 = vmul.f32 %v1541, %v1561
  %v1566 = vmul.f32 %v1556, %v1562
  %1569 = vrot.lane.b32.xlu0 %v1557, 64
  %v1570 = vpop.permute.xlu0 %1569
  %1571 = vrot.lane.b32.xlu0 %v1558, 64
  %v1572 = vpop.permute.xlu0 %1571
  %v1575 = vmul.f32 %v1541, %v1570
  %v1576 = vmul.f32 %v1556, %v1572
  %1579 = vrot.lane.b32.xlu0 %v1575, 32
  %v1580 = vpop.permute.xlu0 %1579
  %1581 = vrot.lane.b32.xlu0 %v1576, 32
  %v1582 = vpop.permute.xlu0 %1581
  %v1585 = vadd.f32 %v1565, %v1580
  %v1586 = vadd.f32 %v1566, %v1582
  %v1587 = vtanh.pop %v1585
  %v1588 = vtanh.pop %v1586
  %1591 = vrot.lane.b32.xlu0 %v1587, 64
  %v1592 = vpop.permute.xlu0 %1591
  %1593 = vrot.lane.b32.xlu0 %v1588, 64
  %v1594 = vpop.permute.xlu0 %1593
  %v1597 = vmul.f32 %v1541, %v1592
  %v1598 = vmul.f32 %v1556, %v1594
  %v1601 = vperm.slane %v1597, 3
  %v1602 = vperm.slane %v1598, 3
  %vm1603 = vcmask 1044484
  %v1604 = vsel %vm1603, %v1602, %v1601
  %1605 = vrot.lane.b32.xlu0 %v1604, 32
  %v1606 = vpop.permute.xlu0 %1605
  %v1609 = vrot.slane %v1485, 5
  %1610 = vrot.lane.b32.xlu0 %v1609, 64
  %v1611 = vpop.permute.xlu0 %1610
  %v1613 = vsel %vm477, %v1606, %v1611
  %v1615 = vrot.slane %v1613, 3
  %v1616 = vsel %vm682, %v1615, 0
  %1618 = vmatpush.msra.mxu0 0.0
  %1619 = vmatpush.msra.mxu0 0.0
  %1620 = vmatpush.msra.mxu0 0.0
  %1621 = vmatpush.msra.mxu0 0.0
  %1622 = vmatpush.msra.mxu0 0.0
  %1623 = vmatpush.msra.mxu0 0.0
  %1624 = vmatpush.msra.mxu0 0.0
  %1625 = vmatpush.msra.mxu0 0.0
  %1626 = vmatpush.msra.mxu0 %v1047
  %1627 = vmatpush.msra.mxu0 %v1046
  %1628 = vmatpush.msra.mxu0 %v1045
  %1629 = vmatpush.msra.mxu0 %v1044
  %1630 = vmatpush.msra.mxu0 %v1043
  %1631 = vmatpush.msra.mxu0 %v1042
  %1632 = vmatpush.msra.mxu0 %v1041
  %1633 = vmatpush.msra.mxu0 %v1040
  %1634 = vmatmul.f32.gmra.mxu0 %v1616
  %v1635 = vpop.f32.mrf.mxu0
  %v1636 = vadd.f32 %v1050, %v1635
  %1637 = vdwg.mxu0
  %v1638 = vxor.u32 %v1636, 2147483648
  %v1639 = vmul.f32 %v1638, 1.442695
  %v1640 = vpow.pop %v1639
  %v1641 = vadd.f32 %v1640, 1.0
  %v1642 = vrcp.pop %v1641
  %v1643 = vmul.f32 %v1641, %v1642
  %v1644 = vsub.f32 1.0, %v1643
  %v1645 = vmul.f32 %v1642, %v1644
  %v1646 = vadd.f32 %v1642, %v1645
  %vm1647 = vweird.f32 %v1641
  %vm1648 = vweird.f32 %v1642
  %vm1649 = vmor %vm1647, %vm1648
  %v1650 = vsel %vm1649, %v1642, %v1646
  %v1651 = vand.u32 2147483647, %v1641
  %vm1652 = vcmp.eq.f32.partialorder %v1651, 8.507059e+37
  %v1653 = vand.u32 %v1641, 2147483648
  %v1654 = vor.u32 1.1754944e-38, %v1653
  %v1655 = vsel %vm1652, %v1654, %v1650
  %v1656 = vmul.f32 1.0, %v1655
  %v1657 = vtanh.pop %v1636
  %v1658 = vmul.f32 %v1656, %v1479
  %1660 = vrot.lane.b32.xlu0 %v1657, 64
  %v1661 = vpop.permute.xlu0 %1660
  %v1663 = vmul.f32 %v1656, %v1661
  %1665 = vrot.lane.b32.xlu0 %v1663, 32
  %v1666 = vpop.permute.xlu0 %1665
  %v1668 = vadd.f32 %v1658, %v1666
  %v1669 = vtanh.pop %v1668
  %1671 = vrot.lane.b32.xlu0 %v1669, 64
  %v1672 = vpop.permute.xlu0 %1671
  %v1674 = vmul.f32 %v1656, %v1672
  %v1675 = vadd.f32 %v1486, %v1674
  %v1676 = vmul.f32 %v1675, 0.25
  %v1677 = vld [vmem:[%s8] sm:$0x1]
  %v1679 = vperm.slane %v1677, 0
  %1680 = vrot.lane.b32.xlu0 %v1679, 96
  %v1681 = vpop.permute.xlu0 %1680
  %v1683 = vmul.f32 %v1676, %v1681
  %1685 = vrot.lane.b32.xlu0 %v1683, 32
  %v1686 = vpop.permute.xlu0 %1685
  %vm1688 = vcmask 254976
  %v1689 = vsel %vm1688, %v1686, 0.0
  %1690 = vadd.xlane.f32.xlu0 %v1689
  %v1691 = vpop.xlane.xlu0 %1690
  %v1692 = vld [vmem:[#allocation2] sm:$0x1]
  %v1694 = vperm.slane %v1692, 0
  %v1696 = vadd.f32 %v1691, %v1694
  %vm1697 = vcmask 1024
  %1698 = vst.msk [vmem:[%s10] sm:$0x3] %vm1697, %v1696
  // Predicated region
  $region42: #{liangwei_forward.1} parent=0 // pred_check
    _
  $region43: #{liangwei_forward.1} parent=0 // pred_check_branch
    %1700 = sbr.rel (0) target = $region45
  $region44: #{liangwei_forward.1} parent=0 // pred_region
    _
  $region45: #{liangwei_forward.1} parent=0 // pred_fallthru
    _
  // Predicated region
  $region46: #{liangwei_forward.1} parent=0 // pred_check
    _
  $region47: #{liangwei_forward.1} parent=0 // pred_check_branch
    %1702 = sbr.rel (0) target = $region49
  $region48: #{liangwei_forward.1} parent=0 // pred_region
    _
  $region49: #{liangwei_forward.1} parent=0 // pred_fallthru
    _

</llo_original>
